<compile_context>
chip_gen: v7x
topology: tpu7x:2x2x1
jax: 0.10.0
libtpu: 0.0.40
codegen_flags: <defaults>
</compile_context>

<pallas_src>
import functools

import jax
import jax.numpy as jnp
from jax import lax
from jax.experimental import pallas as pl
from jax.experimental.pallas import tpu as pltpu


def _round_up(x, m):
    return (x + m - 1) // m * m


def _vmem_budget_bytes():
    """~3/4 of physical VMEM (96 MiB on v5e/v6e, 48 MiB on v7x)."""
    try:
        cap = pltpu.get_tpu_info().vmem_capacity_bytes
    except Exception:
        cap = 64 * 1024 * 1024  # conservative (v7x-sized) fallback
    return min(96 * 1024 * 1024, max(32 * 1024 * 1024, (cap * 3) // 4))


def _attn_kernel(hid_ref, enc_ref, whT_ref, weT_ref, b_ref, v_ref, out_ref,
                 score_ref, hb_ref, *, s_actual):
    # hid_ref   : (tB, D)     f32   decoder hidden tile (resident across S axis)
    # enc_ref   : (tB, tS, E) bf16  encoder-outputs chunk
    # whT_ref   : (D, Dp)     f32   attn weight (hidden part), transposed, lane-padded
    # weT_ref   : (E, Dp)     bf16  attn weight (encoder part), transposed, lane-padded
    # b_ref     : (1, Dp)     f32   bias (lane-padded with zeros)
    # v_ref     : (1, Dp)     f32   scoring vector v (lane-padded with zeros)
    # out_ref   : (tB, Sp)    f32   softmax probs (block resident across S axis)
    # score_ref : (tB, Sp)    f32   VMEM scratch: raw scores
    # hb_ref    : (tB, Dp)    f32   VMEM scratch: hidden projection + bias
    j = pl.program_id(1)
    n_s = pl.num_programs(1)
    tb, ts, e = enc_ref.shape
    dp = weT_ref.shape[1]

    # Hidden projection + fused bias, once per batch tile (S step 0).
    @pl.when(j == 0)
    def _():
        hb_ref[...] = (
            jnp.dot(hid_ref[...], whT_ref[...],
                    preferred_element_type=jnp.float32)
            + b_ref[...]
        )

    # Encoder projection for this S chunk as ONE flattened MXU matmul
    # (tB, tS both 8-aligned -> the leading-dim merge is layout-free).
    enc2 = enc_ref[...].reshape(tb * ts, e)
    e_proj = jnp.dot(enc2, weT_ref[...], preferred_element_type=jnp.float32)
    e_proj = e_proj.reshape(tb, ts, dp)

    # energy = tanh(W @ cat(hidden, enc) + b); padded Dp lanes stay exactly 0.
    energy = jnp.tanh(e_proj + hb_ref[...][:, None, :])          # (tB, tS, Dp) f32

    # score[b, s] = v . energy[b, s, :]  (v_pad = 0 -> padded lanes drop out).
    # VALU multiply + XLU cross-lane reduce (different slots than MXU/EUP).
    score = jnp.sum(energy * v_ref[...][None, :, :], axis=-1)    # (tB, tS)

    off = pl.multiple_of(j * ts, 128)
    score_ref[:, pl.ds(off, ts)] = score

    # Final S step: masked softmax over the full (padded) S axis, exact divide.
    @pl.when(j == n_s - 1)
    def _():
        sc = score_ref[...]                                      # (tB, Sp)
        sp = sc.shape[1]
        col = lax.broadcasted_iota(jnp.int32, (tb, sp), 1)
        valid = col < s_actual
        sc = jnp.where(valid, sc, jnp.float32(-1e30))
        m = jnp.max(sc, axis=-1, keepdims=True)
        ex = jnp.where(valid, jnp.exp(sc - m), jnp.float32(0.0))
        denom = jnp.sum(ex, axis=-1, keepdims=True)
        out_ref[...] = ex / denom                                # exact: rows sum to 1


def attention_forward(hidden, encoder_outputs, W, b, v, *,
                      block_b=None, block_s=None,
                      mxu_dtype=jnp.bfloat16):
    """hidden: (B, D), encoder_outputs: (B, S, E), W: (D, D+E), b: (D,), v: (D,)."""
    B, S, E = encoder_outputs.shape
    D = W.shape[0]
    assert W.shape[1] == D + E
    assert hidden.shape == (B, D)

    budget = _vmem_budget_bytes()

    # ---- lane-pad the projection (output) dim D -> Dp (multiple of 128) ----
    Dp = _round_up(D, 128)
    pad_d = Dp - D
    # concat order in PyTorch is (hidden, encoder_outputs) -> split W that way.
    WhT = jnp.pad(W[:, :D].T, ((0, 0), (0, pad_d))).astype(jnp.float32)   # (D, Dp)
    WeT = jnp.pad(W[:, D:].T, ((0, 0), (0, pad_d))).astype(mxu_dtype)     # (E, Dp)
    b2 = jnp.pad(b, (0, pad_d)).reshape(1, Dp).astype(jnp.float32)        # (1, Dp)
    v2 = jnp.pad(v, (0, pad_d)).reshape(1, Dp).astype(jnp.float32)        # (1, Dp)

    # ---- S tiling: pad S to a multiple of tS (tS a multiple of 128) ----
    if block_s is None:
        block_s = min(512, _round_up(S, 128))
    tS = _round_up(block_s, 128)
    Sp = _round_up(S, tS)
    nS = Sp // tS

    enc_isz = jnp.dtype(mxu_dtype).itemsize

    def footprint(tb):
        enc_bytes = 2 * tb * tS * E * enc_isz          # double-buffered enc chunk
        hid_bytes = 2 * tb * D * 4
        out_bytes = 2 * tb * Sp * 4
        wgt_bytes = 2 * (D * Dp * 4 + E * Dp * enc_isz + 2 * Dp * 4)
        scr_bytes = tb * Sp * 4 + tb * Dp * 4
        return enc_bytes + hid_bytes + out_bytes + wgt_bytes + scr_bytes

    # ---- B tiling: pad B to a multiple of tB (sublane-aligned, never tB=1) ----
    if block_b is None:
        tB = 8
        while tB < 32 and tB < B and footprint(tB * 2) <= budget:
            tB *= 2
    else:
        tB = max(8, _round_up(block_b, 8))
    Bp = _round_up(B, tB)
    nB = Bp // tB
    # v7x has 2 TensorCores: keep >= 2 steps on the parallel batch axis
    # when the batch is big enough to split.
    if nB < 2 and tB > 8 and Bp > 8:
        tB //= 2
        Bp = _round_up(B, tB)
        nB = Bp // tB

    pad_b = Bp - B
    pad_s = Sp - S
    hidden_p = jnp.pad(hidden.astype(jnp.float32), ((0, pad_b), (0, 0)))
    enc_p = jnp.pad(encoder_outputs,
                    ((0, pad_b), (0, pad_s), (0, 0))).astype(mxu_dtype)

    kernel = functools.partial(_attn_kernel, s_actual=S)

    out_p = pl.pallas_call(
        kernel,
        out_shape=jax.ShapeDtypeStruct((Bp, Sp), jnp.float32),
        grid_spec=pltpu.PrefetchScalarGridSpec(
            num_scalar_prefetch=0,
            grid=(nB, nS),
            in_specs=[
                # hidden: constant across the S axis -> stays VMEM-resident.
                pl.BlockSpec((tB, D), lambda i, j: (i, 0)),
                # encoder chunk: streamed over both axes.
                pl.BlockSpec((tB, tS, E), lambda i, j: (i, j, 0)),
                # weights / bias / v: constant block index -> VMEM-resident.
                pl.BlockSpec((D, Dp), lambda i, j: (0, 0)),
                pl.BlockSpec((E, Dp), lambda i, j: (0, 0)),
                pl.BlockSpec((1, Dp), lambda i, j: (0, 0)),
                pl.BlockSpec((1, Dp), lambda i, j: (0, 0)),
            ],
            # Output block constant across the S axis (accumulator pattern);
            # written only at the last S step -> single lane-dense store.
            out_specs=pl.BlockSpec((tB, Sp), lambda i, j: (i, 0)),
            scratch_shapes=[
                pltpu.VMEM((tB, Sp), jnp.float32),   # raw scores
                pltpu.VMEM((tB, Dp), jnp.float32),   # hidden projection + bias
            ],
        ),
        compiler_params=pltpu.CompilerParams(
            # batch tiles independent -> megacore / v7x 2-TC sharding;
            # S axis carries the softmax accumulator -> "arbitrary", last.
            dimension_semantics=("parallel", "arbitrary"),
            vmem_limit_bytes=budget,
        ),
    )(hidden_p, enc_p, WhT, WeT, b2, v2)

    return out_p[:B, :S]


def attention_ref(hidden, encoder_outputs, W, b, v):
    """Pure-JAX reference mirroring the PyTorch forward."""
    B, S, E = encoder_outputs.shape
    hid_rep = jnp.repeat(hidden[:, None, :], S, axis=1)          # (B, S, D)
    cat = jnp.concatenate([hid_rep, encoder_outputs], axis=2)    # (B, S, D+E)
    energy = jnp.tanh(jnp.einsum("bsi,di->bsd", cat, W) + b)     # (B, S, D)
    attn = jnp.einsum("bsd,d->bs", energy, v)                    # (B, S)
    return jax.nn.softmax(attn, axis=1)


if __name__ == "__main__":
    # Small shapes consistent with the module (decoder_hid = 3 * encoder_hid,
    # bidirectional=True -> encoder_n_direction = 2).
    encoder_hid_dem = 32
    decoder_hid_dem = 3 * encoder_hid_dem   # 96
    n_dir = 2
    B, S = 2, 8
    E = encoder_hid_dem * n_dir             # 64
    D = decoder_hid_dem                     # 96
    in_dim = E + D                          # 160

    key = jax.random.PRNGKey(0)
    k_hid, k_enc, k_w, k_b, k_v = jax.random.split(key, 5)

    hidden = jax.random.normal(k_hid, (B, D), dtype=jnp.float32)
    encoder_outputs = jax.random.normal(k_enc, (B, S, E), dtype=jnp.float32)

    # nn.Linear default init: U(-1/sqrt(in_dim), 1/sqrt(in_dim))
    bound = 1.0 / jnp.sqrt(jnp.float32(in_dim))
    W = jax.random.uniform(k_w, (D, in_dim), jnp.float32, -bound, bound)
    b = jax.random.uniform(k_b, (D,), jnp.float32, -bound, bound)
    # self.v = torch.rand(D): U[0, 1)
    v = jax.random.uniform(k_v, (D,), jnp.float32, 0.0, 1.0)

    ref = attention_ref(hidden, encoder_outputs, W, b, v)

    # f32 MXU-input path.
    out_f32 = attention_forward(hidden, encoder_outputs, W, b, v,
                                mxu_dtype=jnp.float32)
    out_f32 = jax.block_until_ready(out_f32)
    assert out_f32.shape == (B, S)
    assert jnp.allclose(out_f32, ref, atol=1e-2, rtol=1e-2), "f32 mismatch"
    assert jnp.allclose(jnp.sum(out_f32, axis=1), 1.0, atol=1e-5), "f32 row sums"

    # Default bf16 MXU-input path (f32 accumulation / f32 softmax); tolerance
    # relaxed to cover the bf16 rounding of encoder_outputs / WeT.
    out_bf16 = attention_forward(hidden, encoder_outputs, W, b, v)
    out_bf16 = jax.block_until_ready(out_bf16)
    assert out_bf16.shape == (B, S)
    assert jnp.allclose(out_bf16, ref, atol=3e-2, rtol=3e-2), "bf16 mismatch"
    assert jnp.allclose(jnp.sum(out_bf16, axis=1), 1.0, atol=1e-5), "bf16 row sums"

    print("KERNEL_OK")
</pallas_src>

<mosaic_0001>
module attributes {stable_mosaic.version = 11 : i64} {
  func.func @_attn_kernel(%arg0: i32, %arg1: i32, %arg2: memref<8x96xf32, #tpu.memory_space<vmem>>, %arg3: memref<8x128x64xf32, #tpu.memory_space<vmem>>, %arg4: memref<96x128xf32, #tpu.memory_space<vmem>>, %arg5: memref<64x128xf32, #tpu.memory_space<vmem>>, %arg6: memref<1x128xf32, #tpu.memory_space<vmem>>, %arg7: memref<1x128xf32, #tpu.memory_space<vmem>>, %arg8: memref<8x128xf32, #tpu.memory_space<vmem>>, %arg9: memref<8x128xf32, #tpu.memory_space<vmem>>, %arg10: memref<8x128xf32, #tpu.memory_space<vmem>>) attributes {dimension_semantics = [#tpu.dimension_semantics<parallel>, #tpu.dimension_semantics<arbitrary>], iteration_bounds = array<i64: 1, 1>, scalar_prefetch = 0 : i64, scratch_operands = 2 : i64, tpu.core_type = #tpu.core_type<tc>, window_params = [{transform_indices = @transform_0, window_bounds = array<i64: 8, 96>}, {transform_indices = @transform_1, window_bounds = array<i64: 8, 128, 64>}, {pipeline_mode = #tpu.pipeline_mode<synchronous>, transform_indices = @transform_2, window_bounds = array<i64: 96, 128>}, {pipeline_mode = #tpu.pipeline_mode<synchronous>, transform_indices = @transform_3, window_bounds = array<i64: 64, 128>}, {pipeline_mode = #tpu.pipeline_mode<synchronous>, transform_indices = @transform_4, window_bounds = array<i64: 1, 128>}, {pipeline_mode = #tpu.pipeline_mode<synchronous>, transform_indices = @transform_5, window_bounds = array<i64: 1, 128>}, {transform_indices = @transform_6, window_bounds = array<i64: 8, 128>}]} {
    %c0_i32 = arith.constant 0 : i32
    %0 = arith.cmpi eq, %arg1, %c0_i32 : i32
    %1 = arith.extui %0 : i1 to i32
    %c0_i32_0 = arith.constant 0 : i32
    %2 = arith.cmpi ne, %1, %c0_i32_0 : i32
    scf.if %2 {
      %c0_13 = arith.constant 0 : index
      %c0_14 = arith.constant 0 : index
      %25 = vector.load %arg2[%c0_13, %c0_14] : memref<8x96xf32, #tpu.memory_space<vmem>>, vector<8x96xf32>
      %c0_15 = arith.constant 0 : index
      %c0_16 = arith.constant 0 : index
      %26 = vector.load %arg4[%c0_15, %c0_16] : memref<96x128xf32, #tpu.memory_space<vmem>>, vector<96x128xf32>
      %cst_17 = arith.constant dense<0.000000e+00> : vector<8x128xf32>
      %27 = tpu.matmul %25, %26, %cst_17 {dimension_numbers = #tpu.dot_dimension_numbers<[1], [0], [0], [1], [0, 0, 1, 1], [], []>} : vector<8x96xf32>, vector<96x128xf32>, vector<8x128xf32> -> vector<8x128xf32>
      %c0_18 = arith.constant 0 : index
      %c0_19 = arith.constant 0 : index
      %28 = vector.load %arg6[%c0_18, %c0_19] : memref<1x128xf32, #tpu.memory_space<vmem>>, vector<1x128xf32>
      %29 = vector.broadcast %28 : vector<1x128xf32> to vector<8x128xf32>
      %30 = arith.addf %27, %29 : vector<8x128xf32>
      %c0_20 = arith.constant 0 : index
      %c0_21 = arith.constant 0 : index
      %31 = vector.load %arg10[%c0_20, %c0_21] : memref<8x128xf32, #tpu.memory_space<vmem>>, vector<8x128xf32>
      tpu.vector_store %arg10[%c0_20, %c0_21], %30 {strides = array<i32>} : memref<8x128xf32, #tpu.memory_space<vmem>>, vector<8x128xf32>,
    } else {
    }
    %c0 = arith.constant 0 : index
    %c0_1 = arith.constant 0 : index
    %c0_2 = arith.constant 0 : index
    %3 = vector.load %arg3[%c0, %c0_1, %c0_2] : memref<8x128x64xf32, #tpu.memory_space<vmem>>, vector<8x128x64xf32>
    %4 = vector.shape_cast %3 : vector<8x128x64xf32> to vector<1024x64xf32>
    %c0_3 = arith.constant 0 : index
    %c0_4 = arith.constant 0 : index
    %5 = vector.load %arg5[%c0_3, %c0_4] : memref<64x128xf32, #tpu.memory_space<vmem>>, vector<64x128xf32>
    %cst = arith.constant dense<0.000000e+00> : vector<1024x128xf32>
    %6 = tpu.matmul %4, %5, %cst {dimension_numbers = #tpu.dot_dimension_numbers<[1], [0], [0], [1], [0, 0, 1, 1], [], []>} : vector<1024x64xf32>, vector<64x128xf32>, vector<1024x128xf32> -> vector<1024x128xf32>
    %7 = vector.shape_cast %6 : vector<1024x128xf32> to vector<8x128x128xf32>
    %c0_5 = arith.constant 0 : index
    %c0_6 = arith.constant 0 : index
    %8 = vector.load %arg10[%c0_5, %c0_6] : memref<8x128xf32, #tpu.memory_space<vmem>>, vector<8x128xf32>
    %9 = vector.shape_cast %8 : vector<8x128xf32> to vector<8x1x128xf32>
    %10 = vector.broadcast %9 : vector<8x1x128xf32> to vector<8x128x128xf32>
    %11 = arith.addf %7, %10 : vector<8x128x128xf32>
    %12 = math.tanh %11 : vector<8x128x128xf32>
    %c0_7 = arith.constant 0 : index
    %c0_8 = arith.constant 0 : index
    %13 = vector.load %arg7[%c0_7, %c0_8] : memref<1x128xf32, #tpu.memory_space<vmem>>, vector<1x128xf32>
    %14 = vector.shape_cast %13 : vector<1x128xf32> to vector<1x1x128xf32>
    %15 = vector.broadcast %14 : vector<1x1x128xf32> to vector<8x128x128xf32>
    %16 = arith.mulf %12, %15 : vector<8x128x128xf32>
    %cst_9 = arith.constant dense<0.000000e+00> : vector<8x128xf32>
    %17 = vector.multi_reduction <add>, %16, %cst_9 [2] : vector<8x128x128xf32> to vector<8x128xf32>
    %c128_i32 = arith.constant 128 : i32
    %18 = arith.muli %arg1, %c128_i32 : i32
    %19 = tpu.assume_multiple %18, 128 : i32
    %c0_10 = arith.constant 0 : index
    %20 = arith.index_cast %19 : i32 to index
    %21 = vector.load %arg9[%c0_10, %20] : memref<8x128xf32, #tpu.memory_space<vmem>>, vector<8x128xf32>
    tpu.vector_store %arg9[%c0_10, %20], %17 {strides = array<i32>} : memref<8x128xf32, #tpu.memory_space<vmem>>, vector<8x128xf32>,
    %c0_i32_11 = arith.constant 0 : i32
    %22 = arith.cmpi eq, %arg1, %c0_i32_11 : i32
    %23 = arith.extui %22 : i1 to i32
    %c0_i32_12 = arith.constant 0 : i32
    %24 = arith.cmpi ne, %23, %c0_i32_12 : i32
    scf.if %24 {
      %c0_13 = arith.constant 0 : index
      %c0_14 = arith.constant 0 : index
      %25 = vector.load %arg9[%c0_13, %c0_14] : memref<8x128xf32, #tpu.memory_space<vmem>>, vector<8x128xf32>
      %26 = tpu.iota {dimensions = array<i32: 1>} : vector<8x128xi32>
      %c8_i32 = arith.constant 8 : i32
      %27 = vector.broadcast %c8_i32 : i32 to vector<8x128xi32>
      %28 = arith.cmpi slt, %26, %27 : vector<8x128xi32>
      %cst_15 = arith.constant -1.000000e+30 : f32
      %29 = vector.broadcast %cst_15 : f32 to vector<8x128xf32>
      %30 = arith.select %28, %25, %29 : vector<8x128xi1>, vector<8x128xf32>
      %cst_16 = arith.constant dense<0xFF800000> : vector<8xf32>
      %31 = vector.multi_reduction <maximumf>, %30, %cst_16 [1] : vector<8x128xf32> to vector<8xf32>
      %32 = vector.shape_cast %31 : vector<8xf32> to vector<8x1xf32>
      %33 = vector.broadcast %32 : vector<8x1xf32> to vector<8x128xf32>
      %34 = arith.subf %30, %33 : vector<8x128xf32>
      %35 = math.exp %34 : vector<8x128xf32>
      %cst_17 = arith.constant 0.000000e+00 : f32
      %36 = vector.broadcast %cst_17 : f32 to vector<8x128xf32>
      %37 = arith.select %28, %35, %36 : vector<8x128xi1>, vector<8x128xf32>
      %cst_18 = arith.constant dense<0.000000e+00> : vector<8xf32>
      %38 = vector.multi_reduction <add>, %37, %cst_18 [1] : vector<8x128xf32> to vector<8xf32>
      %39 = vector.shape_cast %38 : vector<8xf32> to vector<8x1xf32>
      %40 = vector.broadcast %39 : vector<8x1xf32> to vector<8x128xf32>
      %41 = arith.divf %37, %40 : vector<8x128xf32>
      %c0_19 = arith.constant 0 : index
      %c0_20 = arith.constant 0 : index
      %42 = vector.load %arg8[%c0_19, %c0_20] : memref<8x128xf32, #tpu.memory_space<vmem>>, vector<8x128xf32>
      tpu.vector_store %arg8[%c0_19, %c0_20], %41 {strides = array<i32>} : memref<8x128xf32, #tpu.memory_space<vmem>>, vector<8x128xf32>,
    } else {
    }
    return
  }
  func.func @transform_0(%arg0: i32, %arg1: i32) -> (i32, i32) {
    %c0_i32 = arith.constant 0 : i32
    %c0_i32_0 = arith.constant 0 : i32
    return %arg0, %c0_i32 : i32, i32
  }
  func.func @transform_1(%arg0: i32, %arg1: i32) -> (i32, i32, i32) {
    %c0_i32 = arith.constant 0 : i32
    %c0_i32_0 = arith.constant 0 : i32
    return %arg0, %arg1, %c0_i32 : i32, i32, i32
  }
  func.func @transform_2(%arg0: i32, %arg1: i32) -> (i32, i32) {
    %c0_i32 = arith.constant 0 : i32
    %c0_i32_0 = arith.constant 0 : i32
    %c0_i32_1 = arith.constant 0 : i32
    return %c0_i32, %c0_i32_0 : i32, i32
  }
  func.func @transform_3(%arg0: i32, %arg1: i32) -> (i32, i32) {
    %c0_i32 = arith.constant 0 : i32
    %c0_i32_0 = arith.constant 0 : i32
    %c0_i32_1 = arith.constant 0 : i32
    return %c0_i32, %c0_i32_0 : i32, i32
  }
  func.func @transform_4(%arg0: i32, %arg1: i32) -> (i32, i32) {
    %c0_i32 = arith.constant 0 : i32
    %c0_i32_0 = arith.constant 0 : i32
    %c0_i32_1 = arith.constant 0 : i32
    return %c0_i32, %c0_i32_0 : i32, i32
  }
  func.func @transform_5(%arg0: i32, %arg1: i32) -> (i32, i32) {
    %c0_i32 = arith.constant 0 : i32
    %c0_i32_0 = arith.constant 0 : i32
    %c0_i32_1 = arith.constant 0 : i32
    return %c0_i32, %c0_i32_0 : i32, i32
  }
  func.func @transform_6(%arg0: i32, %arg1: i32) -> (i32, i32) {
    %c0_i32 = arith.constant 0 : i32
    %c0_i32_0 = arith.constant 0 : i32
    return %arg0, %c0_i32 : i32, i32
  }
}

</mosaic_0001>

<llo_original>
// kernel: tpu_custom_call.1
$region0: #{tpu_custom_call.1}
  #allocation0 [shape = 'u32[]', space=smem, size = 0x4, offset = 0x4, fixed_abs, tag = 'smem constant byte address 0x4 - core index']
  #allocation1 [shape = 'u32[144,128]{1,0:T(1,128)}', space=vmem, size = 0x12000, scoped, tag = 'internal scratch']
  #allocation2 [shape = 'f32[8,128]{1,0:T(8,128)}', space=vmem, size = 0x1000, scoped, tag = 'scratch operand']
  #allocation3 [shape = 'f32[8,128]{1,0:T(8,128)}', space=vmem, size = 0x1000, scoped, tag = 'scratch operand']
  %s0 = inlined_call_operand.vmem [shape: f32[8,96], index: 0, kind: input, shape index: {}]
  %s1 = inlined_call_operand.vmem [shape: f32[8,128,64], index: 1, kind: input, shape index: {}]
  %s2 = inlined_call_operand.vmem [shape: f32[96,128], index: 2, kind: input, shape index: {}]
  %s3 = inlined_call_operand.vmem [shape: f32[64,128], index: 3, kind: input, shape index: {}]
  %s4 = inlined_call_operand.vmem [shape: f32[1,128], index: 4, kind: input, shape index: {}]
  %s5 = inlined_call_operand.vmem [shape: f32[1,128], index: 5, kind: input, shape index: {}]
  %s6 = inlined_call_operand.hbm [shape: f32[8,128], index: 6, kind: output, shape index: {}]
  %s7 = sld [smem:[#allocation0]]
  $region42: #{tpu_custom_call.1} parent=0
    _
  %s9 = ssub.s32 1, %s7
  %s10 = scalar_select 0, %s9, %s7
  $region1: #{tpu_custom_call.1} parent=0
    #allocation4 [shape = 'u8[4096]{0}', space=vmem, size = 0x1000, scoped, tag = 'output window, operand 0, single buffered']
    #allocation5 [shape = 's32[1]{0}', space=sflag, size = 0x4, scoped, tag = 'scoped memory for tpu_custom_call.1']
    %11 = vsyncpa [#allocation5], 0
    // Predicated region
    $region2: #{tpu_custom_call.1} parent=1 // pred_check
      _
    $region3: #{tpu_custom_call.1} parent=1 // pred_check_branch
      %13 = sbr.rel (0) target = $region5
    $region4: #{tpu_custom_call.1} parent=1 // pred_region
      _
    $region5: #{tpu_custom_call.1} parent=1 // pred_fallthru
      _
    // Predicated region
    $region6: #{tpu_custom_call.1} parent=1 // pred_check
      _
    $region7: #{tpu_custom_call.1} parent=1 // pred_check_branch
      %15 = sbr.rel (0) target = $region9
    $region8: #{tpu_custom_call.1} parent=1 // pred_region
      _
    $region9: #{tpu_custom_call.1} parent=1 // pred_fallthru
      _
    // Predicated region
    $region10: #{tpu_custom_call.1} parent=1 // pred_check
      _
    $region11: #{tpu_custom_call.1} parent=1 // pred_check_branch
      %17 = sbr.rel (0) target = $region13
    $region12: #{tpu_custom_call.1} parent=1 // pred_region
      _
    $region13: #{tpu_custom_call.1} parent=1 // pred_fallthru
      _
    // Predicated region
    $region14: #{tpu_custom_call.1} parent=1 // pred_check
      _
    $region15: #{tpu_custom_call.1} parent=1 // pred_check_branch
      %19 = sbr.rel (0) target = $region17
    $region16: #{tpu_custom_call.1} parent=1 // pred_region
      _
    $region17: #{tpu_custom_call.1} parent=1 // pred_fallthru
      _
    // Predicated region
    $region18: #{tpu_custom_call.1} parent=1 // pred_check
      _
    $region19: #{tpu_custom_call.1} parent=1 // pred_check_branch
      %21 = sbr.rel (0) target = $region21
    $region20: #{tpu_custom_call.1} parent=1 // pred_region
      _
    $region21: #{tpu_custom_call.1} parent=1 // pred_fallthru
      _
    // Predicated region
    $region22: #{tpu_custom_call.1} parent=1 // pred_check
      _
    $region23: #{tpu_custom_call.1} parent=1 // pred_check_branch
      %23 = sbr.rel (0) target = $region25
    $region24: #{tpu_custom_call.1} parent=1 // pred_region
      _
    $region25: #{tpu_custom_call.1} parent=1 // pred_fallthru
      _
    %p24 = scmp.eq.s32.totalorder 0, 0
    // Predicated region
    $region26: #{tpu_custom_call.1} parent=1 // pred_check
      %p25 = pneg %p24
    $region27: #{tpu_custom_call.1} parent=1 // pred_check_branch
      %27 = sbr.rel (%p25) target = $region29
    $region28: #{tpu_custom_call.1} parent=1 // pred_region
      %v28 = vld [vmem:[%s0] sm:$0xff]
      %v29 = vld [vmem:[%s2] sm:$0xff]
      %v30 = vld [vmem:[%s2 + $0x8] sm:$0xff]
      %v31 = vld [vmem:[%s2 + $0x10] sm:$0xff]
      %v32 = vld [vmem:[%s2 + $0x18] sm:$0xff]
      %v33 = vld [vmem:[%s2 + $0x20] sm:$0xff]
      %v34 = vld [vmem:[%s2 + $0x28] sm:$0xff]
      %v35 = vld [vmem:[%s2 + $0x30] sm:$0xff]
      %v36 = vld [vmem:[%s2 + $0x38] sm:$0xff]
      %v37 = vld [vmem:[%s2 + $0x40] sm:$0xff]
      %v38 = vld [vmem:[%s2 + $0x48] sm:$0xff]
      %v39 = vld [vmem:[%s2 + $0x50] sm:$0xff]
      %v40 = vld [vmem:[%s2 + $0x58] sm:$0xff]
      %v41 = vld [vmem:[%s4] sm:$0x1]
      %v43 = vlaneseq
      %v44 = vshrl.u32 %v43, 7
      %v45 = vsub.s32 0, %v44
      %v46 = vrot.slane %v41, %v45
      %vm48 = vcmask 785408
      %v50 = vsel %vm48, %v28, 0
      %52 = vmatprep.subr.mxu0 0.0
      %53 = vmatpush1.msra.mxu0 %v29
      %54 = vmatprep.subr.mxu0 0.0
      %55 = vmatpush1.msra.mxu0 %v30
      %56 = vmatprep.subr.mxu0 0.0
      %57 = vmatpush1.msra.mxu0 %v31
      %58 = vmatprep.subr.mxu0 0.0
      %59 = vmatpush1.msra.mxu0 %v32
      %60 = vmatprep.subr.mxu0 0.0
      %61 = vmatpush1.msra.mxu0 %v33
      %62 = vmatprep.subr.mxu0 0.0
      %63 = vmatpush1.msra.mxu0 %v34
      %64 = vmatprep.subr.mxu0 0.0
      %65 = vmatpush1.msra.mxu0 %v35
      %66 = vmatprep.subr.mxu0 0.0
      %67 = vmatpush1.msra.mxu0 %v36
      %68 = vmatprep.subr.mxu0 0.0
      %69 = vmatpush1.msra.mxu0 %v37
      %70 = vmatprep.subr.mxu0 0.0
      %71 = vmatpush1.msra.mxu0 %v38
      %72 = vmatprep.subr.mxu0 0.0
      %73 = vmatpush1.msra.mxu0 %v39
      %74 = vmatprep.subr.mxu0 0.0
      %75 = vmatpush1.msra.mxu0 %v40
      %76 = vmatprep.subr.mxu0 0.0
      %77 = vmatpush1.msra.mxu0 0.0
      %78 = vmatprep.subr.mxu0 0.0
      %79 = vmatpush1.msra.mxu0 0.0
      %80 = vmatprep.subr.mxu0 0.0
      %81 = vmatpush1.msra.mxu0 0.0
      %82 = vmatprep.subr.mxu0 0.0
      %83 = vmatpush1.msra.mxu0 0.0
      %84 = vmatprep.subr.mxu0 0.0
      %85 = vmatpush1.msra.mxu0 0.0
      %86 = vmatprep.subr.mxu0 0.0
      %87 = vmatpush1.msra.mxu0 0.0
      %88 = vmatprep.subr.mxu0 0.0
      %89 = vmatpush1.msra.mxu0 0.0
      %90 = vmatprep.subr.mxu0 0.0
      %91 = vmatpush1.msra.mxu0 0.0
      %92 = vmatprep.subr.mxu0 0.0
      %93 = vmatpush1.msra.mxu0 0.0
      %94 = vmatprep.subr.mxu0 0.0
      %95 = vmatpush1.msra.mxu0 0.0
      %96 = vmatprep.subr.mxu0 0.0
      %97 = vmatpush1.msra.mxu0 0.0
      %98 = vmatprep.subr.mxu0 0.0
      %99 = vmatpush1.msra.mxu0 0.0
      %100 = vmatprep.subr.mxu0 0.0
      %101 = vmatpush1.msra.mxu0 0.0
      %102 = vmatprep.subr.mxu0 0.0
      %103 = vmatpush1.msra.mxu0 0.0
      %104 = vmatprep.subr.mxu0 0.0
      %105 = vmatpush1.msra.mxu0 0.0
      %106 = vmatprep.subr.mxu0 0.0
      %107 = vmatpush1.msra.mxu0 0.0
      %108 = vmatprep.subr.mxu0 0.0
      %109 = vmatpush1.msra.mxu0 0.0
      %110 = vmatprep.subr.mxu0 0.0
      %111 = vmatpush1.msra.mxu0 0.0
      %112 = vmatprep.subr.mxu0 0.0
      %113 = vmatpush1.msra.mxu0 0.0
      %114 = vmatprep.subr.mxu0 0.0
      %115 = vmatpush1.msra.mxu0 0.0
      %116 = vmatprep.mubr.f32.mxu0 0.0
      %117 = vmatmul.mubr.f32.gmra.mrb[0].mxu0 %v50
      %v118 = vpop.f32.mrb[0].mxu0
      %v119 = vadd.f32 %v46, %v118
      %v120 = vpop.f32.mrb[0].mxu0
      %121 = vdwg.mxu0
      %122 = vst [vmem:[#allocation3] sm:$0xff] %v119
    $region29: #{tpu_custom_call.1} parent=1 // pred_fallthru
      _
    %v123 = vld [vmem:[%s1] sm:$0xff]
    %v124 = vld [vmem:[%s1 + $0x8] sm:$0xff]
    %v125 = vld [vmem:[%s1 + $0x10] sm:$0xff]
    %v126 = vld [vmem:[%s1 + $0x18] sm:$0xff]
    %v127 = vld [vmem:[%s1 + $0x20] sm:$0xff]
    %v128 = vld [vmem:[%s1 + $0x28] sm:$0xff]
    %v129 = vld [vmem:[%s1 + $0x30] sm:$0xff]
    %v130 = vld [vmem:[%s1 + $0x38] sm:$0xff]
    %v131 = vld [vmem:[%s1 + $0x40] sm:$0xff]
    %v132 = vld [vmem:[%s1 + $0x48] sm:$0xff]
    %v133 = vld [vmem:[%s1 + $0x50] sm:$0xff]
    %v134 = vld [vmem:[%s1 + $0x58] sm:$0xff]
    %v135 = vld [vmem:[%s1 + $0x60] sm:$0xff]
    %v136 = vld [vmem:[%s1 + $0x68] sm:$0xff]
    %v137 = vld [vmem:[%s1 + $0x70] sm:$0xff]
    %v138 = vld [vmem:[%s1 + $0x78] sm:$0xff]
    %v139 = vld [vmem:[%s1 + $0x80] sm:$0xff]
    %v140 = vld [vmem:[%s1 + $0x88] sm:$0xff]
    %v141 = vld [vmem:[%s1 + $0x90] sm:$0xff]
    %v142 = vld [vmem:[%s1 + $0x98] sm:$0xff]
    %v143 = vld [vmem:[%s1 + $0xa0] sm:$0xff]
    %v144 = vld [vmem:[%s1 + $0xa8] sm:$0xff]
    %v145 = vld [vmem:[%s1 + $0xb0] sm:$0xff]
    %v146 = vld [vmem:[%s1 + $0xb8] sm:$0xff]
    %v147 = vld [vmem:[%s1 + $0xc0] sm:$0xff]
    %v148 = vld [vmem:[%s1 + $0xc8] sm:$0xff]
    %v149 = vld [vmem:[%s1 + $0xd0] sm:$0xff]
    %v150 = vld [vmem:[%s1 + $0xd8] sm:$0xff]
    %v151 = vld [vmem:[%s1 + $0xe0] sm:$0xff]
    %v152 = vld [vmem:[%s1 + $0xe8] sm:$0xff]
    %v153 = vld [vmem:[%s1 + $0xf0] sm:$0xff]
    %v154 = vld [vmem:[%s1 + $0xf8] sm:$0xff]
    %v155 = vld [vmem:[%s1 + $0x100] sm:$0xff]
    %v156 = vld [vmem:[%s1 + $0x108] sm:$0xff]
    %v157 = vld [vmem:[%s1 + $0x110] sm:$0xff]
    %v158 = vld [vmem:[%s1 + $0x118] sm:$0xff]
    %v159 = vld [vmem:[%s1 + $0x120] sm:$0xff]
    %v160 = vld [vmem:[%s1 + $0x128] sm:$0xff]
    %v161 = vld [vmem:[%s1 + $0x130] sm:$0xff]
    %v162 = vld [vmem:[%s1 + $0x138] sm:$0xff]
    %v163 = vld [vmem:[%s1 + $0x140] sm:$0xff]
    %v164 = vld [vmem:[%s1 + $0x148] sm:$0xff]
    %v165 = vld [vmem:[%s1 + $0x150] sm:$0xff]
    %v166 = vld [vmem:[%s1 + $0x158] sm:$0xff]
    %v167 = vld [vmem:[%s1 + $0x160] sm:$0xff]
    %v168 = vld [vmem:[%s1 + $0x168] sm:$0xff]
    %v169 = vld [vmem:[%s1 + $0x170] sm:$0xff]
    %v170 = vld [vmem:[%s1 + $0x178] sm:$0xff]
    %v171 = vld [vmem:[%s1 + $0x180] sm:$0xff]
    %v172 = vld [vmem:[%s1 + $0x188] sm:$0xff]
    %v173 = vld [vmem:[%s1 + $0x190] sm:$0xff]
    %v174 = vld [vmem:[%s1 + $0x198] sm:$0xff]
    %v175 = vld [vmem:[%s1 + $0x1a0] sm:$0xff]
    %v176 = vld [vmem:[%s1 + $0x1a8] sm:$0xff]
    %v177 = vld [vmem:[%s1 + $0x1b0] sm:$0xff]
    %v178 = vld [vmem:[%s1 + $0x1b8] sm:$0xff]
    %v179 = vld [vmem:[%s1 + $0x1c0] sm:$0xff]
    %v180 = vld [vmem:[%s1 + $0x1c8] sm:$0xff]
    %v181 = vld [vmem:[%s1 + $0x1d0] sm:$0xff]
    %v182 = vld [vmem:[%s1 + $0x1d8] sm:$0xff]
    %v183 = vld [vmem:[%s1 + $0x1e0] sm:$0xff]
    %v184 = vld [vmem:[%s1 + $0x1e8] sm:$0xff]
    %v185 = vld [vmem:[%s1 + $0x1f0] sm:$0xff]
    %v186 = vld [vmem:[%s1 + $0x1f8] sm:$0xff]
    %v187 = vld [vmem:[%s1 + $0x200] sm:$0xff]
    %v188 = vld [vmem:[%s1 + $0x208] sm:$0xff]
    %v189 = vld [vmem:[%s1 + $0x210] sm:$0xff]
    %v190 = vld [vmem:[%s1 + $0x218] sm:$0xff]
    %v191 = vld [vmem:[%s1 + $0x220] sm:$0xff]
    %v192 = vld [vmem:[%s1 + $0x228] sm:$0xff]
    %v193 = vld [vmem:[%s1 + $0x230] sm:$0xff]
    %v194 = vld [vmem:[%s1 + $0x238] sm:$0xff]
    %v195 = vld [vmem:[%s1 + $0x240] sm:$0xff]
    %v196 = vld [vmem:[%s1 + $0x248] sm:$0xff]
    %v197 = vld [vmem:[%s1 + $0x250] sm:$0xff]
    %v198 = vld [vmem:[%s1 + $0x258] sm:$0xff]
    %v199 = vld [vmem:[%s1 + $0x260] sm:$0xff]
    %v200 = vld [vmem:[%s1 + $0x268] sm:$0xff]
    %v201 = vld [vmem:[%s1 + $0x270] sm:$0xff]
    %v202 = vld [vmem:[%s1 + $0x278] sm:$0xff]
    %v203 = vld [vmem:[%s1 + $0x280] sm:$0xff]
    %v204 = vld [vmem:[%s1 + $0x288] sm:$0xff]
    %v205 = vld [vmem:[%s1 + $0x290] sm:$0xff]
    %v206 = vld [vmem:[%s1 + $0x298] sm:$0xff]
    %v207 = vld [vmem:[%s1 + $0x2a0] sm:$0xff]
    %v208 = vld [vmem:[%s1 + $0x2a8] sm:$0xff]
    %v209 = vld [vmem:[%s1 + $0x2b0] sm:$0xff]
    %v210 = vld [vmem:[%s1 + $0x2b8] sm:$0xff]
    %v211 = vld [vmem:[%s1 + $0x2c0] sm:$0xff]
    %v212 = vld [vmem:[%s1 + $0x2c8] sm:$0xff]
    %v213 = vld [vmem:[%s1 + $0x2d0] sm:$0xff]
    %v214 = vld [vmem:[%s1 + $0x2d8] sm:$0xff]
    %v215 = vld [vmem:[%s1 + $0x2e0] sm:$0xff]
    %v216 = vld [vmem:[%s1 + $0x2e8] sm:$0xff]
    %v217 = vld [vmem:[%s1 + $0x2f0] sm:$0xff]
    %v218 = vld [vmem:[%s1 + $0x2f8] sm:$0xff]
    %v219 = vld [vmem:[%s1 + $0x300] sm:$0xff]
    %v220 = vld [vmem:[%s1 + $0x308] sm:$0xff]
    %v221 = vld [vmem:[%s1 + $0x310] sm:$0xff]
    %v222 = vld [vmem:[%s1 + $0x318] sm:$0xff]
    %v223 = vld [vmem:[%s1 + $0x320] sm:$0xff]
    %v224 = vld [vmem:[%s1 + $0x328] sm:$0xff]
    %v225 = vld [vmem:[%s1 + $0x330] sm:$0xff]
    %v226 = vld [vmem:[%s1 + $0x338] sm:$0xff]
    %v227 = vld [vmem:[%s1 + $0x340] sm:$0xff]
    %v228 = vld [vmem:[%s1 + $0x348] sm:$0xff]
    %v229 = vld [vmem:[%s1 + $0x350] sm:$0xff]
    %v230 = vld [vmem:[%s1 + $0x358] sm:$0xff]
    %v231 = vld [vmem:[%s1 + $0x360] sm:$0xff]
    %v232 = vld [vmem:[%s1 + $0x368] sm:$0xff]
    %v233 = vld [vmem:[%s1 + $0x370] sm:$0xff]
    %v234 = vld [vmem:[%s1 + $0x378] sm:$0xff]
    %v235 = vld [vmem:[%s1 + $0x380] sm:$0xff]
    %v236 = vld [vmem:[%s1 + $0x388] sm:$0xff]
    %v237 = vld [vmem:[%s1 + $0x390] sm:$0xff]
    %v238 = vld [vmem:[%s1 + $0x398] sm:$0xff]
    %v239 = vld [vmem:[%s1 + $0x3a0] sm:$0xff]
    %v240 = vld [vmem:[%s1 + $0x3a8] sm:$0xff]
    %v241 = vld [vmem:[%s1 + $0x3b0] sm:$0xff]
    %v242 = vld [vmem:[%s1 + $0x3b8] sm:$0xff]
    %v243 = vld [vmem:[%s1 + $0x3c0] sm:$0xff]
    %v244 = vld [vmem:[%s1 + $0x3c8] sm:$0xff]
    %v245 = vld [vmem:[%s1 + $0x3d0] sm:$0xff]
    %v246 = vld [vmem:[%s1 + $0x3d8] sm:$0xff]
    %v247 = vld [vmem:[%s1 + $0x3e0] sm:$0xff]
    %v248 = vld [vmem:[%s1 + $0x3e8] sm:$0xff]
    %v249 = vld [vmem:[%s1 + $0x3f0] sm:$0xff]
    %v250 = vld [vmem:[%s1 + $0x3f8] sm:$0xff]
    %v251 = vld [vmem:[%s3] sm:$0xff]
    %v252 = vld [vmem:[%s3 + $0x8] sm:$0xff]
    %v253 = vld [vmem:[%s3 + $0x10] sm:$0xff]
    %v254 = vld [vmem:[%s3 + $0x18] sm:$0xff]
    %v255 = vld [vmem:[%s3 + $0x20] sm:$0xff]
    %v256 = vld [vmem:[%s3 + $0x28] sm:$0xff]
    %v257 = vld [vmem:[%s3 + $0x30] sm:$0xff]
    %v258 = vld [vmem:[%s3 + $0x38] sm:$0xff]
    %vm259 = vcmask 523264
    %v261 = vsel %vm259, %v123, 0
    %v264 = vsel %vm259, %v124, 0
    %v267 = vsel %vm259, %v125, 0
    %v270 = vsel %vm259, %v126, 0
    %v273 = vsel %vm259, %v127, 0
    %v276 = vsel %vm259, %v128, 0
    %v279 = vsel %vm259, %v129, 0
    %v282 = vsel %vm259, %v130, 0
    %v285 = vsel %vm259, %v131, 0
    %v288 = vsel %vm259, %v132, 0
    %v291 = vsel %vm259, %v133, 0
    %v294 = vsel %vm259, %v134, 0
    %v297 = vsel %vm259, %v135, 0
    %v300 = vsel %vm259, %v136, 0
    %v303 = vsel %vm259, %v137, 0
    %v306 = vsel %vm259, %v138, 0
    %v309 = vsel %vm259, %v139, 0
    %v312 = vsel %vm259, %v140, 0
    %v315 = vsel %vm259, %v141, 0
    %v318 = vsel %vm259, %v142, 0
    %v321 = vsel %vm259, %v143, 0
    %v324 = vsel %vm259, %v144, 0
    %v327 = vsel %vm259, %v145, 0
    %v330 = vsel %vm259, %v146, 0
    %v333 = vsel %vm259, %v147, 0
    %v336 = vsel %vm259, %v148, 0
    %v339 = vsel %vm259, %v149, 0
    %v342 = vsel %vm259, %v150, 0
    %v345 = vsel %vm259, %v151, 0
    %v348 = vsel %vm259, %v152, 0
    %v351 = vsel %vm259, %v153, 0
    %v354 = vsel %vm259, %v154, 0
    %v357 = vsel %vm259, %v155, 0
    %v360 = vsel %vm259, %v156, 0
    %v363 = vsel %vm259, %v157, 0
    %v366 = vsel %vm259, %v158, 0
    %v369 = vsel %vm259, %v159, 0
    %v372 = vsel %vm259, %v160, 0
    %v375 = vsel %vm259, %v161, 0
    %v378 = vsel %vm259, %v162, 0
    %v381 = vsel %vm259, %v163, 0
    %v384 = vsel %vm259, %v164, 0
    %v387 = vsel %vm259, %v165, 0
    %v390 = vsel %vm259, %v166, 0
    %v393 = vsel %vm259, %v167, 0
    %v396 = vsel %vm259, %v168, 0
    %v399 = vsel %vm259, %v169, 0
    %v402 = vsel %vm259, %v170, 0
    %v405 = vsel %vm259, %v171, 0
    %v408 = vsel %vm259, %v172, 0
    %v411 = vsel %vm259, %v173, 0
    %v414 = vsel %vm259, %v174, 0
    %v417 = vsel %vm259, %v175, 0
    %v420 = vsel %vm259, %v176, 0
    %v423 = vsel %vm259, %v177, 0
    %v426 = vsel %vm259, %v178, 0
    %v429 = vsel %vm259, %v179, 0
    %v432 = vsel %vm259, %v180, 0
    %v435 = vsel %vm259, %v181, 0
    %v438 = vsel %vm259, %v182, 0
    %v441 = vsel %vm259, %v183, 0
    %v444 = vsel %vm259, %v184, 0
    %v447 = vsel %vm259, %v185, 0
    %v450 = vsel %vm259, %v186, 0
    %v453 = vsel %vm259, %v187, 0
    %v456 = vsel %vm259, %v188, 0
    %v459 = vsel %vm259, %v189, 0
    %v462 = vsel %vm259, %v190, 0
    %v465 = vsel %vm259, %v191, 0
    %v468 = vsel %vm259, %v192, 0
    %v471 = vsel %vm259, %v193, 0
    %v474 = vsel %vm259, %v194, 0
    %v477 = vsel %vm259, %v195, 0
    %v480 = vsel %vm259, %v196, 0
    %v483 = vsel %vm259, %v197, 0
    %v486 = vsel %vm259, %v198, 0
    %v489 = vsel %vm259, %v199, 0
    %v492 = vsel %vm259, %v200, 0
    %v495 = vsel %vm259, %v201, 0
    %v498 = vsel %vm259, %v202, 0
    %v501 = vsel %vm259, %v203, 0
    %v504 = vsel %vm259, %v204, 0
    %v507 = vsel %vm259, %v205, 0
    %v510 = vsel %vm259, %v206, 0
    %v513 = vsel %vm259, %v207, 0
    %v516 = vsel %vm259, %v208, 0
    %v519 = vsel %vm259, %v209, 0
    %v522 = vsel %vm259, %v210, 0
    %v525 = vsel %vm259, %v211, 0
    %v528 = vsel %vm259, %v212, 0
    %v531 = vsel %vm259, %v213, 0
    %v534 = vsel %vm259, %v214, 0
    %v537 = vsel %vm259, %v215, 0
    %v540 = vsel %vm259, %v216, 0
    %v543 = vsel %vm259, %v217, 0
    %v546 = vsel %vm259, %v218, 0
    %v549 = vsel %vm259, %v219, 0
    %v552 = vsel %vm259, %v220, 0
    %v555 = vsel %vm259, %v221, 0
    %v558 = vsel %vm259, %v222, 0
    %v561 = vsel %vm259, %v223, 0
    %v564 = vsel %vm259, %v224, 0
    %v567 = vsel %vm259, %v225, 0
    %v570 = vsel %vm259, %v226, 0
    %v573 = vsel %vm259, %v227, 0
    %v576 = vsel %vm259, %v228, 0
    %v579 = vsel %vm259, %v229, 0
    %v582 = vsel %vm259, %v230, 0
    %v585 = vsel %vm259, %v231, 0
    %v588 = vsel %vm259, %v232, 0
    %v591 = vsel %vm259, %v233, 0
    %v594 = vsel %vm259, %v234, 0
    %v597 = vsel %vm259, %v235, 0
    %v600 = vsel %vm259, %v236, 0
    %v603 = vsel %vm259, %v237, 0
    %v606 = vsel %vm259, %v238, 0
    %v609 = vsel %vm259, %v239, 0
    %v612 = vsel %vm259, %v240, 0
    %v615 = vsel %vm259, %v241, 0
    %v618 = vsel %vm259, %v242, 0
    %v621 = vsel %vm259, %v243, 0
    %v624 = vsel %vm259, %v244, 0
    %v627 = vsel %vm259, %v245, 0
    %v630 = vsel %vm259, %v246, 0
    %v633 = vsel %vm259, %v247, 0
    %v636 = vsel %vm259, %v248, 0
    %v639 = vsel %vm259, %v249, 0
    %v642 = vsel %vm259, %v250, 0
    %644 = vmatprep.subr.mxu0 0.0
    %645 = vmatpush1.msra.mxu0 %v251
    %646 = vmatprep.subr.mxu0 0.0
    %647 = vmatpush1.msra.mxu0 %v252
    %648 = vmatprep.subr.mxu0 0.0
    %649 = vmatpush1.msra.mxu0 %v253
    %650 = vmatprep.subr.mxu0 0.0
    %651 = vmatpush1.msra.mxu0 %v254
    %652 = vmatprep.subr.mxu0 0.0
    %653 = vmatpush1.msra.mxu0 %v255
    %654 = vmatprep.subr.mxu0 0.0
    %655 = vmatpush1.msra.mxu0 %v256
    %656 = vmatprep.subr.mxu0 0.0
    %657 = vmatpush1.msra.mxu0 %v257
    %658 = vmatprep.subr.mxu0 0.0
    %659 = vmatpush1.msra.mxu0 %v258
    %660 = vmatprep.subr.mxu0 0.0
    %661 = vmatpush1.msra.mxu0 0.0
    %662 = vmatprep.subr.mxu0 0.0
    %663 = vmatpush1.msra.mxu0 0.0
    %664 = vmatprep.subr.mxu0 0.0
    %665 = vmatpush1.msra.mxu0 0.0
    %666 = vmatprep.subr.mxu0 0.0
    %667 = vmatpush1.msra.mxu0 0.0
    %668 = vmatprep.subr.mxu0 0.0
    %669 = vmatpush1.msra.mxu0 0.0
    %670 = vmatprep.subr.mxu0 0.0
    %671 = vmatpush1.msra.mxu0 0.0
    %672 = vmatprep.subr.mxu0 0.0
    %673 = vmatpush1.msra.mxu0 0.0
    %674 = vmatprep.subr.mxu0 0.0
    %675 = vmatpush1.msra.mxu0 0.0
    %676 = vmatprep.subr.mxu0 0.0
    %677 = vmatpush1.msra.mxu0 0.0
    %678 = vmatprep.subr.mxu0 0.0
    %679 = vmatpush1.msra.mxu0 0.0
    %680 = vmatprep.subr.mxu0 0.0
    %681 = vmatpush1.msra.mxu0 0.0
    %682 = vmatprep.subr.mxu0 0.0
    %683 = vmatpush1.msra.mxu0 0.0
    %684 = vmatprep.subr.mxu0 0.0
    %685 = vmatpush1.msra.mxu0 0.0
    %686 = vmatprep.subr.mxu0 0.0
    %687 = vmatpush1.msra.mxu0 0.0
    %688 = vmatprep.subr.mxu0 0.0
    %689 = vmatpush1.msra.mxu0 0.0
    %690 = vmatprep.subr.mxu0 0.0
    %691 = vmatpush1.msra.mxu0 0.0
    %692 = vmatprep.subr.mxu0 0.0
    %693 = vmatpush1.msra.mxu0 0.0
    %694 = vmatprep.subr.mxu0 0.0
    %695 = vmatpush1.msra.mxu0 0.0
    %696 = vmatprep.subr.mxu0 0.0
    %697 = vmatpush1.msra.mxu0 0.0
    %698 = vmatprep.subr.mxu0 0.0
    %699 = vmatpush1.msra.mxu0 0.0
    %700 = vmatprep.subr.mxu0 0.0
    %701 = vmatpush1.msra.mxu0 0.0
    %702 = vmatprep.subr.mxu0 0.0
    %703 = vmatpush1.msra.mxu0 0.0
    %704 = vmatprep.subr.mxu0 0.0
    %705 = vmatpush1.msra.mxu0 0.0
    %706 = vmatprep.subr.mxu0 0.0
    %707 = vmatpush1.msra.mxu0 0.0
    %708 = vmatprep.mubr.f32.mxu0 0.0
    %709 = vmatmul.mubr.f32.gmra.mrb[0].mxu0 %v261
    %v710 = vpop.f32.mrb[0].mxu0
    %v711 = vadd.f32 0.0, %v710
    %v712 = vpop.f32.mrb[0].mxu0
    %713 = vmatprep.mubr.f32.mxu0 0.0
    %714 = vmatmul.mubr.f32.gmra.mrb[0].mxu0 %v264
    %v715 = vpop.f32.mrb[0].mxu0
    %v716 = vadd.f32 0.0, %v715
    %v717 = vpop.f32.mrb[0].mxu0
    %718 = vmatprep.mubr.f32.mxu0 0.0
    %719 = vmatmul.mubr.f32.gmra.mrb[0].mxu0 %v267
    %v720 = vpop.f32.mrb[0].mxu0
    %v721 = vadd.f32 0.0, %v720
    %v722 = vpop.f32.mrb[0].mxu0
    %723 = vmatprep.mubr.f32.mxu0 0.0
    %724 = vmatmul.mubr.f32.gmra.mrb[0].mxu0 %v270
    %v725 = vpop.f32.mrb[0].mxu0
    %v726 = vadd.f32 0.0, %v725
    %v727 = vpop.f32.mrb[0].mxu0
    %728 = vmatprep.mubr.f32.mxu0 0.0
    %729 = vmatmul.mubr.f32.gmra.mrb[0].mxu0 %v273
    %v730 = vpop.f32.mrb[0].mxu0
    %v731 = vadd.f32 0.0, %v730
    %v732 = vpop.f32.mrb[0].mxu0
    %733 = vmatprep.mubr.f32.mxu0 0.0
    %734 = vmatmul.mubr.f32.gmra.mrb[0].mxu0 %v276
    %v735 = vpop.f32.mrb[0].mxu0
    %v736 = vadd.f32 0.0, %v735
    %v737 = vpop.f32.mrb[0].mxu0
    %738 = vmatprep.mubr.f32.mxu0 0.0
    %739 = vmatmul.mubr.f32.gmra.mrb[0].mxu0 %v279
    %v740 = vpop.f32.mrb[0].mxu0
    %v741 = vadd.f32 0.0, %v740
    %v742 = vpop.f32.mrb[0].mxu0
    %743 = vmatprep.mubr.f32.mxu0 0.0
    %744 = vmatmul.mubr.f32.gmra.mrb[0].mxu0 %v282
    %v745 = vpop.f32.mrb[0].mxu0
    %v746 = vadd.f32 0.0, %v745
    %v747 = vpop.f32.mrb[0].mxu0
    %748 = vmatprep.mubr.f32.mxu0 0.0
    %749 = vmatmul.mubr.f32.gmra.mrb[0].mxu0 %v285
    %v750 = vpop.f32.mrb[0].mxu0
    %v751 = vadd.f32 0.0, %v750
    %v752 = vpop.f32.mrb[0].mxu0
    %753 = vmatprep.mubr.f32.mxu0 0.0
    %754 = vmatmul.mubr.f32.gmra.mrb[0].mxu0 %v288
    %v755 = vpop.f32.mrb[0].mxu0
    %v756 = vadd.f32 0.0, %v755
    %v757 = vpop.f32.mrb[0].mxu0
    %758 = vmatprep.mubr.f32.mxu0 0.0
    %759 = vmatmul.mubr.f32.gmra.mrb[0].mxu0 %v291
    %v760 = vpop.f32.mrb[0].mxu0
    %v761 = vadd.f32 0.0, %v760
    %v762 = vpop.f32.mrb[0].mxu0
    %763 = vmatprep.mubr.f32.mxu0 0.0
    %764 = vmatmul.mubr.f32.gmra.mrb[0].mxu0 %v294
    %v765 = vpop.f32.mrb[0].mxu0
    %v766 = vadd.f32 0.0, %v765
    %v767 = vpop.f32.mrb[0].mxu0
    %768 = vmatprep.mubr.f32.mxu0 0.0
    %769 = vmatmul.mubr.f32.gmra.mrb[0].mxu0 %v297
    %v770 = vpop.f32.mrb[0].mxu0
    %v771 = vadd.f32 0.0, %v770
    %v772 = vpop.f32.mrb[0].mxu0
    %773 = vmatprep.mubr.f32.mxu0 0.0
    %774 = vmatmul.mubr.f32.gmra.mrb[0].mxu0 %v300
    %v775 = vpop.f32.mrb[0].mxu0
    %v776 = vadd.f32 0.0, %v775
    %v777 = vpop.f32.mrb[0].mxu0
    %778 = vmatprep.mubr.f32.mxu0 0.0
    %779 = vmatmul.mubr.f32.gmra.mrb[0].mxu0 %v303
    %v780 = vpop.f32.mrb[0].mxu0
    %v781 = vadd.f32 0.0, %v780
    %v782 = vpop.f32.mrb[0].mxu0
    %783 = vmatprep.mubr.f32.mxu0 0.0
    %784 = vmatmul.mubr.f32.gmra.mrb[0].mxu0 %v306
    %v785 = vpop.f32.mrb[0].mxu0
    %v786 = vadd.f32 0.0, %v785
    %v787 = vpop.f32.mrb[0].mxu0
    %788 = vmatprep.mubr.f32.mxu0 0.0
    %789 = vmatmul.mubr.f32.gmra.mrb[0].mxu0 %v309
    %v790 = vpop.f32.mrb[0].mxu0
    %v791 = vadd.f32 0.0, %v790
    %v792 = vpop.f32.mrb[0].mxu0
    %793 = vmatprep.mubr.f32.mxu0 0.0
    %794 = vmatmul.mubr.f32.gmra.mrb[0].mxu0 %v312
    %v795 = vpop.f32.mrb[0].mxu0
    %v796 = vadd.f32 0.0, %v795
    %v797 = vpop.f32.mrb[0].mxu0
    %798 = vmatprep.mubr.f32.mxu0 0.0
    %799 = vmatmul.mubr.f32.gmra.mrb[0].mxu0 %v315
    %v800 = vpop.f32.mrb[0].mxu0
    %v801 = vadd.f32 0.0, %v800
    %v802 = vpop.f32.mrb[0].mxu0
    %803 = vmatprep.mubr.f32.mxu0 0.0
    %804 = vmatmul.mubr.f32.gmra.mrb[0].mxu0 %v318
    %v805 = vpop.f32.mrb[0].mxu0
    %v806 = vadd.f32 0.0, %v805
    %v807 = vpop.f32.mrb[0].mxu0
    %808 = vmatprep.mubr.f32.mxu0 0.0
    %809 = vmatmul.mubr.f32.gmra.mrb[0].mxu0 %v321
    %v810 = vpop.f32.mrb[0].mxu0
    %v811 = vadd.f32 0.0, %v810
    %v812 = vpop.f32.mrb[0].mxu0
    %813 = vmatprep.mubr.f32.mxu0 0.0
    %814 = vmatmul.mubr.f32.gmra.mrb[0].mxu0 %v324
    %v815 = vpop.f32.mrb[0].mxu0
    %v816 = vadd.f32 0.0, %v815
    %v817 = vpop.f32.mrb[0].mxu0
    %818 = vmatprep.mubr.f32.mxu0 0.0
    %819 = vmatmul.mubr.f32.gmra.mrb[0].mxu0 %v327
    %v820 = vpop.f32.mrb[0].mxu0
    %v821 = vadd.f32 0.0, %v820
    %v822 = vpop.f32.mrb[0].mxu0
    %823 = vmatprep.mubr.f32.mxu0 0.0
    %824 = vmatmul.mubr.f32.gmra.mrb[0].mxu0 %v330
    %v825 = vpop.f32.mrb[0].mxu0
    %v826 = vadd.f32 0.0, %v825
    %v827 = vpop.f32.mrb[0].mxu0
    %828 = vmatprep.mubr.f32.mxu0 0.0
    %829 = vmatmul.mubr.f32.gmra.mrb[0].mxu0 %v333
    %v830 = vpop.f32.mrb[0].mxu0
    %v831 = vadd.f32 0.0, %v830
    %v832 = vpop.f32.mrb[0].mxu0
    %833 = vmatprep.mubr.f32.mxu0 0.0
    %834 = vmatmul.mubr.f32.gmra.mrb[0].mxu0 %v336
    %v835 = vpop.f32.mrb[0].mxu0
    %v836 = vadd.f32 0.0, %v835
    %v837 = vpop.f32.mrb[0].mxu0
    %838 = vmatprep.mubr.f32.mxu0 0.0
    %839 = vmatmul.mubr.f32.gmra.mrb[0].mxu0 %v339
    %v840 = vpop.f32.mrb[0].mxu0
    %v841 = vadd.f32 0.0, %v840
    %v842 = vpop.f32.mrb[0].mxu0
    %843 = vmatprep.mubr.f32.mxu0 0.0
    %844 = vmatmul.mubr.f32.gmra.mrb[0].mxu0 %v342
    %v845 = vpop.f32.mrb[0].mxu0
    %v846 = vadd.f32 0.0, %v845
    %v847 = vpop.f32.mrb[0].mxu0
    %848 = vmatprep.mubr.f32.mxu0 0.0
    %849 = vmatmul.mubr.f32.gmra.mrb[0].mxu0 %v345
    %v850 = vpop.f32.mrb[0].mxu0
    %v851 = vadd.f32 0.0, %v850
    %v852 = vpop.f32.mrb[0].mxu0
    %853 = vmatprep.mubr.f32.mxu0 0.0
    %854 = vmatmul.mubr.f32.gmra.mrb[0].mxu0 %v348
    %v855 = vpop.f32.mrb[0].mxu0
    %v856 = vadd.f32 0.0, %v855
    %v857 = vpop.f32.mrb[0].mxu0
    %858 = vmatprep.mubr.f32.mxu0 0.0
    %859 = vmatmul.mubr.f32.gmra.mrb[0].mxu0 %v351
    %v860 = vpop.f32.mrb[0].mxu0
    %v861 = vadd.f32 0.0, %v860
    %v862 = vpop.f32.mrb[0].mxu0
    %863 = vmatprep.mubr.f32.mxu0 0.0
    %864 = vmatmul.mubr.f32.gmra.mrb[0].mxu0 %v354
    %v865 = vpop.f32.mrb[0].mxu0
    %v866 = vadd.f32 0.0, %v865
    %v867 = vpop.f32.mrb[0].mxu0
    %868 = vmatprep.mubr.f32.mxu0 0.0
    %869 = vmatmul.mubr.f32.gmra.mrb[0].mxu0 %v357
    %v870 = vpop.f32.mrb[0].mxu0
    %v871 = vadd.f32 0.0, %v870
    %v872 = vpop.f32.mrb[0].mxu0
    %873 = vmatprep.mubr.f32.mxu0 0.0
    %874 = vmatmul.mubr.f32.gmra.mrb[0].mxu0 %v360
    %v875 = vpop.f32.mrb[0].mxu0
    %v876 = vadd.f32 0.0, %v875
    %v877 = vpop.f32.mrb[0].mxu0
    %878 = vmatprep.mubr.f32.mxu0 0.0
    %879 = vmatmul.mubr.f32.gmra.mrb[0].mxu0 %v363
    %v880 = vpop.f32.mrb[0].mxu0
    %v881 = vadd.f32 0.0, %v880
    %v882 = vpop.f32.mrb[0].mxu0
    %883 = vmatprep.mubr.f32.mxu0 0.0
    %884 = vmatmul.mubr.f32.gmra.mrb[0].mxu0 %v366
    %v885 = vpop.f32.mrb[0].mxu0
    %v886 = vadd.f32 0.0, %v885
    %v887 = vpop.f32.mrb[0].mxu0
    %888 = vmatprep.mubr.f32.mxu0 0.0
    %889 = vmatmul.mubr.f32.gmra.mrb[0].mxu0 %v369
    %v890 = vpop.f32.mrb[0].mxu0
    %v891 = vadd.f32 0.0, %v890
    %v892 = vpop.f32.mrb[0].mxu0
    %893 = vmatprep.mubr.f32.mxu0 0.0
    %894 = vmatmul.mubr.f32.gmra.mrb[0].mxu0 %v372
    %v895 = vpop.f32.mrb[0].mxu0
    %v896 = vadd.f32 0.0, %v895
    %v897 = vpop.f32.mrb[0].mxu0
    %898 = vmatprep.mubr.f32.mxu0 0.0
    %899 = vmatmul.mubr.f32.gmra.mrb[0].mxu0 %v375
    %v900 = vpop.f32.mrb[0].mxu0
    %v901 = vadd.f32 0.0, %v900
    %v902 = vpop.f32.mrb[0].mxu0
    %903 = vmatprep.mubr.f32.mxu0 0.0
    %904 = vmatmul.mubr.f32.gmra.mrb[0].mxu0 %v378
    %v905 = vpop.f32.mrb[0].mxu0
    %v906 = vadd.f32 0.0, %v905
    %v907 = vpop.f32.mrb[0].mxu0
    %908 = vmatprep.mubr.f32.mxu0 0.0
    %909 = vmatmul.mubr.f32.gmra.mrb[0].mxu0 %v381
    %v910 = vpop.f32.mrb[0].mxu0
    %v911 = vadd.f32 0.0, %v910
    %v912 = vpop.f32.mrb[0].mxu0
    %913 = vmatprep.mubr.f32.mxu0 0.0
    %914 = vmatmul.mubr.f32.gmra.mrb[0].mxu0 %v384
    %v915 = vpop.f32.mrb[0].mxu0
    %v916 = vadd.f32 0.0, %v915
    %v917 = vpop.f32.mrb[0].mxu0
    %918 = vmatprep.mubr.f32.mxu0 0.0
    %919 = vmatmul.mubr.f32.gmra.mrb[0].mxu0 %v387
    %v920 = vpop.f32.mrb[0].mxu0
    %v921 = vadd.f32 0.0, %v920
    %v922 = vpop.f32.mrb[0].mxu0
    %923 = vmatprep.mubr.f32.mxu0 0.0
    %924 = vmatmul.mubr.f32.gmra.mrb[0].mxu0 %v390
    %v925 = vpop.f32.mrb[0].mxu0
    %v926 = vadd.f32 0.0, %v925
    %v927 = vpop.f32.mrb[0].mxu0
    %928 = vmatprep.mubr.f32.mxu0 0.0
    %929 = vmatmul.mubr.f32.gmra.mrb[0].mxu0 %v393
    %v930 = vpop.f32.mrb[0].mxu0
    %v931 = vadd.f32 0.0, %v930
    %v932 = vpop.f32.mrb[0].mxu0
    %933 = vmatprep.mubr.f32.mxu0 0.0
    %934 = vmatmul.mubr.f32.gmra.mrb[0].mxu0 %v396
    %v935 = vpop.f32.mrb[0].mxu0
    %v936 = vadd.f32 0.0, %v935
    %v937 = vpop.f32.mrb[0].mxu0
    %938 = vmatprep.mubr.f32.mxu0 0.0
    %939 = vmatmul.mubr.f32.gmra.mrb[0].mxu0 %v399
    %v940 = vpop.f32.mrb[0].mxu0
    %v941 = vadd.f32 0.0, %v940
    %v942 = vpop.f32.mrb[0].mxu0
    %943 = vmatprep.mubr.f32.mxu0 0.0
    %944 = vmatmul.mubr.f32.gmra.mrb[0].mxu0 %v402
    %v945 = vpop.f32.mrb[0].mxu0
    %v946 = vadd.f32 0.0, %v945
    %v947 = vpop.f32.mrb[0].mxu0
    %948 = vmatprep.mubr.f32.mxu0 0.0
    %949 = vmatmul.mubr.f32.gmra.mrb[0].mxu0 %v405
    %v950 = vpop.f32.mrb[0].mxu0
    %v951 = vadd.f32 0.0, %v950
    %v952 = vpop.f32.mrb[0].mxu0
    %953 = vmatprep.mubr.f32.mxu0 0.0
    %954 = vmatmul.mubr.f32.gmra.mrb[0].mxu0 %v408
    %v955 = vpop.f32.mrb[0].mxu0
    %v956 = vadd.f32 0.0, %v955
    %v957 = vpop.f32.mrb[0].mxu0
    %958 = vmatprep.mubr.f32.mxu0 0.0
    %959 = vmatmul.mubr.f32.gmra.mrb[0].mxu0 %v411
    %v960 = vpop.f32.mrb[0].mxu0
    %v961 = vadd.f32 0.0, %v960
    %v962 = vpop.f32.mrb[0].mxu0
    %963 = vmatprep.mubr.f32.mxu0 0.0
    %964 = vmatmul.mubr.f32.gmra.mrb[0].mxu0 %v414
    %v965 = vpop.f32.mrb[0].mxu0
    %v966 = vadd.f32 0.0, %v965
    %v967 = vpop.f32.mrb[0].mxu0
    %968 = vmatprep.mubr.f32.mxu0 0.0
    %969 = vmatmul.mubr.f32.gmra.mrb[0].mxu0 %v417
    %v970 = vpop.f32.mrb[0].mxu0
    %v971 = vadd.f32 0.0, %v970
    %v972 = vpop.f32.mrb[0].mxu0
    %973 = vmatprep.mubr.f32.mxu0 0.0
    %974 = vmatmul.mubr.f32.gmra.mrb[0].mxu0 %v420
    %v975 = vpop.f32.mrb[0].mxu0
    %v976 = vadd.f32 0.0, %v975
    %v977 = vpop.f32.mrb[0].mxu0
    %978 = vmatprep.mubr.f32.mxu0 0.0
    %979 = vmatmul.mubr.f32.gmra.mrb[0].mxu0 %v423
    %v980 = vpop.f32.mrb[0].mxu0
    %v981 = vadd.f32 0.0, %v980
    %v982 = vpop.f32.mrb[0].mxu0
    %983 = vmatprep.mubr.f32.mxu0 0.0
    %984 = vmatmul.mubr.f32.gmra.mrb[0].mxu0 %v426
    %v985 = vpop.f32.mrb[0].mxu0
    %v986 = vadd.f32 0.0, %v985
    %v987 = vpop.f32.mrb[0].mxu0
    %988 = vmatprep.mubr.f32.mxu0 0.0
    %989 = vmatmul.mubr.f32.gmra.mrb[0].mxu0 %v429
    %v990 = vpop.f32.mrb[0].mxu0
    %v991 = vadd.f32 0.0, %v990
    %v992 = vpop.f32.mrb[0].mxu0
    %993 = vmatprep.mubr.f32.mxu0 0.0
    %994 = vmatmul.mubr.f32.gmra.mrb[0].mxu0 %v432
    %v995 = vpop.f32.mrb[0].mxu0
    %v996 = vadd.f32 0.0, %v995
    %v997 = vpop.f32.mrb[0].mxu0
    %998 = vmatprep.mubr.f32.mxu0 0.0
    %999 = vmatmul.mubr.f32.gmra.mrb[0].mxu0 %v435
    %v1000 = vpop.f32.mrb[0].mxu0
    %v1001 = vadd.f32 0.0, %v1000
    %v1002 = vpop.f32.mrb[0].mxu0
    %1003 = vmatprep.mubr.f32.mxu0 0.0
    %1004 = vmatmul.mubr.f32.gmra.mrb[0].mxu0 %v438
    %v1005 = vpop.f32.mrb[0].mxu0
    %v1006 = vadd.f32 0.0, %v1005
    %v1007 = vpop.f32.mrb[0].mxu0
    %1008 = vmatprep.mubr.f32.mxu0 0.0
    %1009 = vmatmul.mubr.f32.gmra.mrb[0].mxu0 %v441
    %v1010 = vpop.f32.mrb[0].mxu0
    %v1011 = vadd.f32 0.0, %v1010
    %v1012 = vpop.f32.mrb[0].mxu0
    %1013 = vmatprep.mubr.f32.mxu0 0.0
    %1014 = vmatmul.mubr.f32.gmra.mrb[0].mxu0 %v444
    %v1015 = vpop.f32.mrb[0].mxu0
    %v1016 = vadd.f32 0.0, %v1015
    %v1017 = vpop.f32.mrb[0].mxu0
    %1018 = vmatprep.mubr.f32.mxu0 0.0
    %1019 = vmatmul.mubr.f32.gmra.mrb[0].mxu0 %v447
    %v1020 = vpop.f32.mrb[0].mxu0
    %v1021 = vadd.f32 0.0, %v1020
    %v1022 = vpop.f32.mrb[0].mxu0
    %1023 = vmatprep.mubr.f32.mxu0 0.0
    %1024 = vmatmul.mubr.f32.gmra.mrb[0].mxu0 %v450
    %v1025 = vpop.f32.mrb[0].mxu0
    %v1026 = vadd.f32 0.0, %v1025
    %v1027 = vpop.f32.mrb[0].mxu0
    %1028 = vmatprep.mubr.f32.mxu0 0.0
    %1029 = vmatmul.mubr.f32.gmra.mrb[0].mxu0 %v453
    %v1030 = vpop.f32.mrb[0].mxu0
    %v1031 = vadd.f32 0.0, %v1030
    %v1032 = vpop.f32.mrb[0].mxu0
    %1033 = vmatprep.mubr.f32.mxu0 0.0
    %1034 = vmatmul.mubr.f32.gmra.mrb[0].mxu0 %v456
    %v1035 = vpop.f32.mrb[0].mxu0
    %v1036 = vadd.f32 0.0, %v1035
    %v1037 = vpop.f32.mrb[0].mxu0
    %1038 = vmatprep.mubr.f32.mxu0 0.0
    %1039 = vmatmul.mubr.f32.gmra.mrb[0].mxu0 %v459
    %v1040 = vpop.f32.mrb[0].mxu0
    %v1041 = vadd.f32 0.0, %v1040
    %v1042 = vpop.f32.mrb[0].mxu0
    %1043 = vmatprep.mubr.f32.mxu0 0.0
    %1044 = vmatmul.mubr.f32.gmra.mrb[0].mxu0 %v462
    %v1045 = vpop.f32.mrb[0].mxu0
    %v1046 = vadd.f32 0.0, %v1045
    %v1047 = vpop.f32.mrb[0].mxu0
    %1048 = vmatprep.mubr.f32.mxu0 0.0
    %1049 = vmatmul.mubr.f32.gmra.mrb[0].mxu0 %v465
    %v1050 = vpop.f32.mrb[0].mxu0
    %v1051 = vadd.f32 0.0, %v1050
    %v1052 = vpop.f32.mrb[0].mxu0
    %1053 = vmatprep.mubr.f32.mxu0 0.0
    %1054 = vmatmul.mubr.f32.gmra.mrb[0].mxu0 %v468
    %v1055 = vpop.f32.mrb[0].mxu0
    %v1056 = vadd.f32 0.0, %v1055
    %v1057 = vpop.f32.mrb[0].mxu0
    %1058 = vmatprep.mubr.f32.mxu0 0.0
    %1059 = vmatmul.mubr.f32.gmra.mrb[0].mxu0 %v471
    %v1060 = vpop.f32.mrb[0].mxu0
    %v1061 = vadd.f32 0.0, %v1060
    %v1062 = vpop.f32.mrb[0].mxu0
    %1063 = vmatprep.mubr.f32.mxu0 0.0
    %1064 = vmatmul.mubr.f32.gmra.mrb[0].mxu0 %v474
    %v1065 = vpop.f32.mrb[0].mxu0
    %v1066 = vadd.f32 0.0, %v1065
    %v1067 = vpop.f32.mrb[0].mxu0
    %1068 = vmatprep.mubr.f32.mxu0 0.0
    %1069 = vmatmul.mubr.f32.gmra.mrb[0].mxu0 %v477
    %v1070 = vpop.f32.mrb[0].mxu0
    %v1071 = vadd.f32 0.0, %v1070
    %v1072 = vpop.f32.mrb[0].mxu0
    %1073 = vmatprep.mubr.f32.mxu0 0.0
    %1074 = vmatmul.mubr.f32.gmra.mrb[0].mxu0 %v480
    %v1075 = vpop.f32.mrb[0].mxu0
    %v1076 = vadd.f32 0.0, %v1075
    %v1077 = vpop.f32.mrb[0].mxu0
    %1078 = vmatprep.mubr.f32.mxu0 0.0
    %1079 = vmatmul.mubr.f32.gmra.mrb[0].mxu0 %v483
    %v1080 = vpop.f32.mrb[0].mxu0
    %v1081 = vadd.f32 0.0, %v1080
    %v1082 = vpop.f32.mrb[0].mxu0
    %1083 = vmatprep.mubr.f32.mxu0 0.0
    %1084 = vmatmul.mubr.f32.gmra.mrb[0].mxu0 %v486
    %v1085 = vpop.f32.mrb[0].mxu0
    %v1086 = vadd.f32 0.0, %v1085
    %v1087 = vpop.f32.mrb[0].mxu0
    %1088 = vmatprep.mubr.f32.mxu0 0.0
    %1089 = vmatmul.mubr.f32.gmra.mrb[0].mxu0 %v489
    %v1090 = vpop.f32.mrb[0].mxu0
    %v1091 = vadd.f32 0.0, %v1090
    %v1092 = vpop.f32.mrb[0].mxu0
    %1093 = vmatprep.mubr.f32.mxu0 0.0
    %1094 = vmatmul.mubr.f32.gmra.mrb[0].mxu0 %v492
    %v1095 = vpop.f32.mrb[0].mxu0
    %v1096 = vadd.f32 0.0, %v1095
    %v1097 = vpop.f32.mrb[0].mxu0
    %1098 = vmatprep.mubr.f32.mxu0 0.0
    %1099 = vmatmul.mubr.f32.gmra.mrb[0].mxu0 %v495
    %v1100 = vpop.f32.mrb[0].mxu0
    %v1101 = vadd.f32 0.0, %v1100
    %v1102 = vpop.f32.mrb[0].mxu0
    %1103 = vmatprep.mubr.f32.mxu0 0.0
    %1104 = vmatmul.mubr.f32.gmra.mrb[0].mxu0 %v498
    %v1105 = vpop.f32.mrb[0].mxu0
    %v1106 = vadd.f32 0.0, %v1105
    %v1107 = vpop.f32.mrb[0].mxu0
    %1108 = vmatprep.mubr.f32.mxu0 0.0
    %1109 = vmatmul.mubr.f32.gmra.mrb[0].mxu0 %v501
    %v1110 = vpop.f32.mrb[0].mxu0
    %v1111 = vadd.f32 0.0, %v1110
    %v1112 = vpop.f32.mrb[0].mxu0
    %1113 = vmatprep.mubr.f32.mxu0 0.0
    %1114 = vmatmul.mubr.f32.gmra.mrb[0].mxu0 %v504
    %v1115 = vpop.f32.mrb[0].mxu0
    %v1116 = vadd.f32 0.0, %v1115
    %v1117 = vpop.f32.mrb[0].mxu0
    %1118 = vmatprep.mubr.f32.mxu0 0.0
    %1119 = vmatmul.mubr.f32.gmra.mrb[0].mxu0 %v507
    %v1120 = vpop.f32.mrb[0].mxu0
    %v1121 = vadd.f32 0.0, %v1120
    %v1122 = vpop.f32.mrb[0].mxu0
    %1123 = vmatprep.mubr.f32.mxu0 0.0
    %1124 = vmatmul.mubr.f32.gmra.mrb[0].mxu0 %v510
    %v1125 = vpop.f32.mrb[0].mxu0
    %v1126 = vadd.f32 0.0, %v1125
    %v1127 = vpop.f32.mrb[0].mxu0
    %1128 = vmatprep.mubr.f32.mxu0 0.0
    %1129 = vmatmul.mubr.f32.gmra.mrb[0].mxu0 %v513
    %v1130 = vpop.f32.mrb[0].mxu0
    %v1131 = vadd.f32 0.0, %v1130
    %v1132 = vpop.f32.mrb[0].mxu0
    %1133 = vmatprep.mubr.f32.mxu0 0.0
    %1134 = vmatmul.mubr.f32.gmra.mrb[0].mxu0 %v516
    %v1135 = vpop.f32.mrb[0].mxu0
    %v1136 = vadd.f32 0.0, %v1135
    %v1137 = vpop.f32.mrb[0].mxu0
    %1138 = vmatprep.mubr.f32.mxu0 0.0
    %1139 = vmatmul.mubr.f32.gmra.mrb[0].mxu0 %v519
    %v1140 = vpop.f32.mrb[0].mxu0
    %v1141 = vadd.f32 0.0, %v1140
    %v1142 = vpop.f32.mrb[0].mxu0
    %1143 = vmatprep.mubr.f32.mxu0 0.0
    %1144 = vmatmul.mubr.f32.gmra.mrb[0].mxu0 %v522
    %v1145 = vpop.f32.mrb[0].mxu0
    %v1146 = vadd.f32 0.0, %v1145
    %v1147 = vpop.f32.mrb[0].mxu0
    %1148 = vmatprep.mubr.f32.mxu0 0.0
    %1149 = vmatmul.mubr.f32.gmra.mrb[0].mxu0 %v525
    %v1150 = vpop.f32.mrb[0].mxu0
    %v1151 = vadd.f32 0.0, %v1150
    %v1152 = vpop.f32.mrb[0].mxu0
    %1153 = vmatprep.mubr.f32.mxu0 0.0
    %1154 = vmatmul.mubr.f32.gmra.mrb[0].mxu0 %v528
    %v1155 = vpop.f32.mrb[0].mxu0
    %v1156 = vadd.f32 0.0, %v1155
    %v1157 = vpop.f32.mrb[0].mxu0
    %1158 = vmatprep.mubr.f32.mxu0 0.0
    %1159 = vmatmul.mubr.f32.gmra.mrb[0].mxu0 %v531
    %v1160 = vpop.f32.mrb[0].mxu0
    %v1161 = vadd.f32 0.0, %v1160
    %v1162 = vpop.f32.mrb[0].mxu0
    %1163 = vmatprep.mubr.f32.mxu0 0.0
    %1164 = vmatmul.mubr.f32.gmra.mrb[0].mxu0 %v534
    %v1165 = vpop.f32.mrb[0].mxu0
    %v1166 = vadd.f32 0.0, %v1165
    %v1167 = vpop.f32.mrb[0].mxu0
    %1168 = vmatprep.mubr.f32.mxu0 0.0
    %1169 = vmatmul.mubr.f32.gmra.mrb[0].mxu0 %v537
    %v1170 = vpop.f32.mrb[0].mxu0
    %v1171 = vadd.f32 0.0, %v1170
    %v1172 = vpop.f32.mrb[0].mxu0
    %1173 = vmatprep.mubr.f32.mxu0 0.0
    %1174 = vmatmul.mubr.f32.gmra.mrb[0].mxu0 %v540
    %v1175 = vpop.f32.mrb[0].mxu0
    %v1176 = vadd.f32 0.0, %v1175
    %v1177 = vpop.f32.mrb[0].mxu0
    %1178 = vmatprep.mubr.f32.mxu0 0.0
    %1179 = vmatmul.mubr.f32.gmra.mrb[0].mxu0 %v543
    %v1180 = vpop.f32.mrb[0].mxu0
    %v1181 = vadd.f32 0.0, %v1180
    %v1182 = vpop.f32.mrb[0].mxu0
    %1183 = vmatprep.mubr.f32.mxu0 0.0
    %1184 = vmatmul.mubr.f32.gmra.mrb[0].mxu0 %v546
    %v1185 = vpop.f32.mrb[0].mxu0
    %v1186 = vadd.f32 0.0, %v1185
    %v1187 = vpop.f32.mrb[0].mxu0
    %1188 = vmatprep.mubr.f32.mxu0 0.0
    %1189 = vmatmul.mubr.f32.gmra.mrb[0].mxu0 %v549
    %v1190 = vpop.f32.mrb[0].mxu0
    %v1191 = vadd.f32 0.0, %v1190
    %v1192 = vpop.f32.mrb[0].mxu0
    %1193 = vmatprep.mubr.f32.mxu0 0.0
    %1194 = vmatmul.mubr.f32.gmra.mrb[0].mxu0 %v552
    %v1195 = vpop.f32.mrb[0].mxu0
    %v1196 = vadd.f32 0.0, %v1195
    %v1197 = vpop.f32.mrb[0].mxu0
    %1198 = vmatprep.mubr.f32.mxu0 0.0
    %1199 = vmatmul.mubr.f32.gmra.mrb[0].mxu0 %v555
    %v1200 = vpop.f32.mrb[0].mxu0
    %v1201 = vadd.f32 0.0, %v1200
    %v1202 = vpop.f32.mrb[0].mxu0
    %1203 = vmatprep.mubr.f32.mxu0 0.0
    %1204 = vmatmul.mubr.f32.gmra.mrb[0].mxu0 %v558
    %v1205 = vpop.f32.mrb[0].mxu0
    %v1206 = vadd.f32 0.0, %v1205
    %v1207 = vpop.f32.mrb[0].mxu0
    %1208 = vmatprep.mubr.f32.mxu0 0.0
    %1209 = vmatmul.mubr.f32.gmra.mrb[0].mxu0 %v561
    %v1210 = vpop.f32.mrb[0].mxu0
    %v1211 = vadd.f32 0.0, %v1210
    %v1212 = vpop.f32.mrb[0].mxu0
    %1213 = vmatprep.mubr.f32.mxu0 0.0
    %1214 = vmatmul.mubr.f32.gmra.mrb[0].mxu0 %v564
    %v1215 = vpop.f32.mrb[0].mxu0
    %v1216 = vadd.f32 0.0, %v1215
    %v1217 = vpop.f32.mrb[0].mxu0
    %1218 = vmatprep.mubr.f32.mxu0 0.0
    %1219 = vmatmul.mubr.f32.gmra.mrb[0].mxu0 %v567
    %v1220 = vpop.f32.mrb[0].mxu0
    %v1221 = vadd.f32 0.0, %v1220
    %v1222 = vpop.f32.mrb[0].mxu0
    %1223 = vmatprep.mubr.f32.mxu0 0.0
    %1224 = vmatmul.mubr.f32.gmra.mrb[0].mxu0 %v570
    %v1225 = vpop.f32.mrb[0].mxu0
    %v1226 = vadd.f32 0.0, %v1225
    %v1227 = vpop.f32.mrb[0].mxu0
    %1228 = vmatprep.mubr.f32.mxu0 0.0
    %1229 = vmatmul.mubr.f32.gmra.mrb[0].mxu0 %v573
    %v1230 = vpop.f32.mrb[0].mxu0
    %v1231 = vadd.f32 0.0, %v1230
    %v1232 = vpop.f32.mrb[0].mxu0
    %1233 = vmatprep.mubr.f32.mxu0 0.0
    %1234 = vmatmul.mubr.f32.gmra.mrb[0].mxu0 %v576
    %v1235 = vpop.f32.mrb[0].mxu0
    %v1236 = vadd.f32 0.0, %v1235
    %v1237 = vpop.f32.mrb[0].mxu0
    %1238 = vmatprep.mubr.f32.mxu0 0.0
    %1239 = vmatmul.mubr.f32.gmra.mrb[0].mxu0 %v579
    %v1240 = vpop.f32.mrb[0].mxu0
    %v1241 = vadd.f32 0.0, %v1240
    %v1242 = vpop.f32.mrb[0].mxu0
    %1243 = vmatprep.mubr.f32.mxu0 0.0
    %1244 = vmatmul.mubr.f32.gmra.mrb[0].mxu0 %v582
    %v1245 = vpop.f32.mrb[0].mxu0
    %v1246 = vadd.f32 0.0, %v1245
    %v1247 = vpop.f32.mrb[0].mxu0
    %1248 = vmatprep.mubr.f32.mxu0 0.0
    %1249 = vmatmul.mubr.f32.gmra.mrb[0].mxu0 %v585
    %v1250 = vpop.f32.mrb[0].mxu0
    %v1251 = vadd.f32 0.0, %v1250
    %v1252 = vpop.f32.mrb[0].mxu0
    %1253 = vmatprep.mubr.f32.mxu0 0.0
    %1254 = vmatmul.mubr.f32.gmra.mrb[0].mxu0 %v588
    %v1255 = vpop.f32.mrb[0].mxu0
    %v1256 = vadd.f32 0.0, %v1255
    %v1257 = vpop.f32.mrb[0].mxu0
    %1258 = vmatprep.mubr.f32.mxu0 0.0
    %1259 = vmatmul.mubr.f32.gmra.mrb[0].mxu0 %v591
    %v1260 = vpop.f32.mrb[0].mxu0
    %v1261 = vadd.f32 0.0, %v1260
    %v1262 = vpop.f32.mrb[0].mxu0
    %1263 = vmatprep.mubr.f32.mxu0 0.0
    %1264 = vmatmul.mubr.f32.gmra.mrb[0].mxu0 %v594
    %v1265 = vpop.f32.mrb[0].mxu0
    %v1266 = vadd.f32 0.0, %v1265
    %v1267 = vpop.f32.mrb[0].mxu0
    %1268 = vmatprep.mubr.f32.mxu0 0.0
    %1269 = vmatmul.mubr.f32.gmra.mrb[0].mxu0 %v597
    %v1270 = vpop.f32.mrb[0].mxu0
    %v1271 = vadd.f32 0.0, %v1270
    %v1272 = vpop.f32.mrb[0].mxu0
    %1273 = vmatprep.mubr.f32.mxu0 0.0
    %1274 = vmatmul.mubr.f32.gmra.mrb[0].mxu0 %v600
    %v1275 = vpop.f32.mrb[0].mxu0
    %v1276 = vadd.f32 0.0, %v1275
    %v1277 = vpop.f32.mrb[0].mxu0
    %1278 = vmatprep.mubr.f32.mxu0 0.0
    %1279 = vmatmul.mubr.f32.gmra.mrb[0].mxu0 %v603
    %v1280 = vpop.f32.mrb[0].mxu0
    %v1281 = vadd.f32 0.0, %v1280
    %v1282 = vpop.f32.mrb[0].mxu0
    %1283 = vmatprep.mubr.f32.mxu0 0.0
    %1284 = vmatmul.mubr.f32.gmra.mrb[0].mxu0 %v606
    %v1285 = vpop.f32.mrb[0].mxu0
    %v1286 = vadd.f32 0.0, %v1285
    %v1287 = vpop.f32.mrb[0].mxu0
    %1288 = vmatprep.mubr.f32.mxu0 0.0
    %1289 = vmatmul.mubr.f32.gmra.mrb[0].mxu0 %v609
    %v1290 = vpop.f32.mrb[0].mxu0
    %v1291 = vadd.f32 0.0, %v1290
    %v1292 = vpop.f32.mrb[0].mxu0
    %1293 = vmatprep.mubr.f32.mxu0 0.0
    %1294 = vmatmul.mubr.f32.gmra.mrb[0].mxu0 %v612
    %v1295 = vpop.f32.mrb[0].mxu0
    %v1296 = vadd.f32 0.0, %v1295
    %v1297 = vpop.f32.mrb[0].mxu0
    %1298 = vmatprep.mubr.f32.mxu0 0.0
    %1299 = vmatmul.mubr.f32.gmra.mrb[0].mxu0 %v615
    %v1300 = vpop.f32.mrb[0].mxu0
    %v1301 = vadd.f32 0.0, %v1300
    %v1302 = vpop.f32.mrb[0].mxu0
    %1303 = vmatprep.mubr.f32.mxu0 0.0
    %1304 = vmatmul.mubr.f32.gmra.mrb[0].mxu0 %v618
    %v1305 = vpop.f32.mrb[0].mxu0
    %v1306 = vadd.f32 0.0, %v1305
    %v1307 = vpop.f32.mrb[0].mxu0
    %1308 = vmatprep.mubr.f32.mxu0 0.0
    %1309 = vmatmul.mubr.f32.gmra.mrb[0].mxu0 %v621
    %v1310 = vpop.f32.mrb[0].mxu0
    %v1311 = vadd.f32 0.0, %v1310
    %v1312 = vpop.f32.mrb[0].mxu0
    %1313 = vmatprep.mubr.f32.mxu0 0.0
    %1314 = vmatmul.mubr.f32.gmra.mrb[0].mxu0 %v624
    %v1315 = vpop.f32.mrb[0].mxu0
    %v1316 = vadd.f32 0.0, %v1315
    %v1317 = vpop.f32.mrb[0].mxu0
    %1318 = vmatprep.mubr.f32.mxu0 0.0
    %1319 = vmatmul.mubr.f32.gmra.mrb[0].mxu0 %v627
    %v1320 = vpop.f32.mrb[0].mxu0
    %v1321 = vadd.f32 0.0, %v1320
    %v1322 = vpop.f32.mrb[0].mxu0
    %1323 = vmatprep.mubr.f32.mxu0 0.0
    %1324 = vmatmul.mubr.f32.gmra.mrb[0].mxu0 %v630
    %v1325 = vpop.f32.mrb[0].mxu0
    %v1326 = vadd.f32 0.0, %v1325
    %v1327 = vpop.f32.mrb[0].mxu0
    %1328 = vmatprep.mubr.f32.mxu0 0.0
    %1329 = vmatmul.mubr.f32.gmra.mrb[0].mxu0 %v633
    %v1330 = vpop.f32.mrb[0].mxu0
    %v1331 = vadd.f32 0.0, %v1330
    %v1332 = vpop.f32.mrb[0].mxu0
    %1333 = vmatprep.mubr.f32.mxu0 0.0
    %1334 = vmatmul.mubr.f32.gmra.mrb[0].mxu0 %v636
    %v1335 = vpop.f32.mrb[0].mxu0
    %v1336 = vadd.f32 0.0, %v1335
    %v1337 = vpop.f32.mrb[0].mxu0
    %1338 = vmatprep.mubr.f32.mxu0 0.0
    %1339 = vmatmul.mubr.f32.gmra.mrb[0].mxu0 %v639
    %v1340 = vpop.f32.mrb[0].mxu0
    %v1341 = vadd.f32 0.0, %v1340
    %v1342 = vpop.f32.mrb[0].mxu0
    %1343 = vmatprep.mubr.f32.mxu0 0.0
    %1344 = vmatmul.mubr.f32.gmra.mrb[0].mxu0 %v642
    %v1345 = vpop.f32.mrb[0].mxu0
    %v1346 = vadd.f32 0.0, %v1345
    %v1347 = vpop.f32.mrb[0].mxu0
    %1348 = vdwg.mxu0
    %v1349 = vld [vmem:[#allocation3] sm:$0xff]
    %v1351 = vcombine.high %v1349, %v1349
    %v1353 = vunpack.c.l.s4 1966171168
    %v1354 = vunpack.c.0.s8 %v1353
    %v1355 = vlaneseq
    %v1356 = vshrl.u32 %v1355, 7
    %v1357 = vsub.s32 %v1354, %v1356
    %v1358 = vrot.slane %v1349, %v1357
    %v1360 = vunpack.c.l.s4 1966171168
    %v1361 = vunpack.c.0.s8 %v1360
    %v1362 = vlaneseq
    %v1363 = vshrl.u32 %v1362, 7
    %v1364 = vsub.s32 %v1361, %v1363
    %v1365 = vrot.slane %v1351, %v1364
    %v1366 = vcombine.high %v1358, %v1358
    %v1367 = vcombine.high %v1365, %v1365
    %v1369 = vunpack.c.l.s4 1966171168
    %v1370 = vunpack.c.0.s8 %v1369
    %v1371 = vlaneseq
    %v1372 = vshrl.u32 %v1371, 7
    %v1373 = vsub.s32 %v1370, %v1372
    %v1374 = vrot.slane %v1358, %v1373
    %v1376 = vunpack.c.l.s4 1966171168
    %v1377 = vunpack.c.0.s8 %v1376
    %v1378 = vlaneseq
    %v1379 = vshrl.u32 %v1378, 7
    %v1380 = vsub.s32 %v1377, %v1379
    %v1381 = vrot.slane %v1365, %v1380
    %v1383 = vunpack.c.l.s4 1966171168
    %v1384 = vunpack.c.0.s8 %v1383
    %v1385 = vlaneseq
    %v1386 = vshrl.u32 %v1385, 7
    %v1387 = vsub.s32 %v1384, %v1386
    %v1388 = vrot.slane %v1366, %v1387
    %v1390 = vunpack.c.l.s4 1966171168
    %v1391 = vunpack.c.0.s8 %v1390
    %v1392 = vlaneseq
    %v1393 = vshrl.u32 %v1392, 7
    %v1394 = vsub.s32 %v1391, %v1393
    %v1395 = vrot.slane %v1367, %v1394
    %v1396 = vcombine.high %v1374, %v1374
    %v1397 = vcombine.high %v1381, %v1381
    %v1398 = vcombine.high %v1388, %v1388
    %v1399 = vcombine.high %v1395, %v1395
    %v1400 = vlaneseq
    %v1401 = vshrl.u32 %v1400, 7
    %v1402 = vsub.s32 0, %v1401
    %v1403 = vrot.slane %v1374, %v1402
    %v1404 = vlaneseq
    %v1405 = vshrl.u32 %v1404, 7
    %v1406 = vsub.s32 0, %v1405
    %v1407 = vrot.slane %v1388, %v1406
    %v1408 = vlaneseq
    %v1409 = vshrl.u32 %v1408, 7
    %v1410 = vsub.s32 0, %v1409
    %v1411 = vrot.slane %v1396, %v1410
    %v1412 = vlaneseq
    %v1413 = vshrl.u32 %v1412, 7
    %v1414 = vsub.s32 0, %v1413
    %v1415 = vrot.slane %v1398, %v1414
    %v1416 = vlaneseq
    %v1417 = vshrl.u32 %v1416, 7
    %v1418 = vsub.s32 0, %v1417
    %v1419 = vrot.slane %v1381, %v1418
    %v1420 = vlaneseq
    %v1421 = vshrl.u32 %v1420, 7
    %v1422 = vsub.s32 0, %v1421
    %v1423 = vrot.slane %v1395, %v1422
    %v1424 = vlaneseq
    %v1425 = vshrl.u32 %v1424, 7
    %v1426 = vsub.s32 0, %v1425
    %v1427 = vrot.slane %v1397, %v1426
    %v1428 = vlaneseq
    %v1429 = vshrl.u32 %v1428, 7
    %v1430 = vsub.s32 0, %v1429
    %v1431 = vrot.slane %v1399, %v1430
    %v1440 = vadd.f32 %v711, %v1403
    %v1441 = vadd.f32 %v716, %v1403
    %v1442 = vadd.f32 %v721, %v1403
    %v1443 = vadd.f32 %v726, %v1403
    %v1444 = vadd.f32 %v731, %v1403
    %v1445 = vadd.f32 %v736, %v1403
    %v1446 = vadd.f32 %v741, %v1403
    %v1447 = vadd.f32 %v746, %v1403
    %v1448 = vadd.f32 %v751, %v1403
    %v1449 = vadd.f32 %v756, %v1403
    %v1450 = vadd.f32 %v761, %v1403
    %v1451 = vadd.f32 %v766, %v1403
    %v1452 = vadd.f32 %v771, %v1403
    %v1453 = vadd.f32 %v776, %v1403
    %v1454 = vadd.f32 %v781, %v1403
    %v1455 = vadd.f32 %v786, %v1403
    %v1456 = vadd.f32 %v791, %v1407
    %v1457 = vadd.f32 %v796, %v1407
    %v1458 = vadd.f32 %v801, %v1407
    %v1459 = vadd.f32 %v806, %v1407
    %v1460 = vadd.f32 %v811, %v1407
    %v1461 = vadd.f32 %v816, %v1407
    %v1462 = vadd.f32 %v821, %v1407
    %v1463 = vadd.f32 %v826, %v1407
    %v1464 = vadd.f32 %v831, %v1407
    %v1465 = vadd.f32 %v836, %v1407
    %v1466 = vadd.f32 %v841, %v1407
    %v1467 = vadd.f32 %v846, %v1407
    %v1468 = vadd.f32 %v851, %v1407
    %v1469 = vadd.f32 %v856, %v1407
    %v1470 = vadd.f32 %v861, %v1407
    %v1471 = vadd.f32 %v866, %v1407
    %v1472 = vadd.f32 %v871, %v1411
    %v1473 = vadd.f32 %v876, %v1411
    %v1474 = vadd.f32 %v881, %v1411
    %v1475 = vadd.f32 %v886, %v1411
    %v1476 = vadd.f32 %v891, %v1411
    %v1477 = vadd.f32 %v896, %v1411
    %v1478 = vadd.f32 %v901, %v1411
    %v1479 = vadd.f32 %v906, %v1411
    %v1480 = vadd.f32 %v911, %v1411
    %v1481 = vadd.f32 %v916, %v1411
    %v1482 = vadd.f32 %v921, %v1411
    %v1483 = vadd.f32 %v926, %v1411
    %v1484 = vadd.f32 %v931, %v1411
    %v1485 = vadd.f32 %v936, %v1411
    %v1486 = vadd.f32 %v941, %v1411
    %v1487 = vadd.f32 %v946, %v1411
    %v1488 = vadd.f32 %v951, %v1415
    %v1489 = vadd.f32 %v956, %v1415
    %v1490 = vadd.f32 %v961, %v1415
    %v1491 = vadd.f32 %v966, %v1415
    %v1492 = vadd.f32 %v971, %v1415
    %v1493 = vadd.f32 %v976, %v1415
    %v1494 = vadd.f32 %v981, %v1415
    %v1495 = vadd.f32 %v986, %v1415
    %v1496 = vadd.f32 %v991, %v1415
    %v1497 = vadd.f32 %v996, %v1415
    %v1498 = vadd.f32 %v1001, %v1415
    %v1499 = vadd.f32 %v1006, %v1415
    %v1500 = vadd.f32 %v1011, %v1415
    %v1501 = vadd.f32 %v1016, %v1415
    %v1502 = vadd.f32 %v1021, %v1415
    %v1503 = vadd.f32 %v1026, %v1415
    %v1504 = vadd.f32 %v1031, %v1419
    %v1505 = vadd.f32 %v1036, %v1419
    %v1506 = vadd.f32 %v1041, %v1419
    %v1507 = vadd.f32 %v1046, %v1419
    %v1508 = vadd.f32 %v1051, %v1419
    %v1509 = vadd.f32 %v1056, %v1419
    %v1510 = vadd.f32 %v1061, %v1419
    %v1511 = vadd.f32 %v1066, %v1419
    %v1512 = vadd.f32 %v1071, %v1419
    %v1513 = vadd.f32 %v1076, %v1419
    %v1514 = vadd.f32 %v1081, %v1419
    %v1515 = vadd.f32 %v1086, %v1419
    %v1516 = vadd.f32 %v1091, %v1419
    %v1517 = vadd.f32 %v1096, %v1419
    %v1518 = vadd.f32 %v1101, %v1419
    %v1519 = vadd.f32 %v1106, %v1419
    %v1520 = vadd.f32 %v1111, %v1423
    %v1521 = vadd.f32 %v1116, %v1423
    %v1522 = vadd.f32 %v1121, %v1423
    %v1523 = vadd.f32 %v1126, %v1423
    %v1524 = vadd.f32 %v1131, %v1423
    %v1525 = vadd.f32 %v1136, %v1423
    %v1526 = vadd.f32 %v1141, %v1423
    %v1527 = vadd.f32 %v1146, %v1423
    %v1528 = vadd.f32 %v1151, %v1423
    %v1529 = vadd.f32 %v1156, %v1423
    %v1530 = vadd.f32 %v1161, %v1423
    %v1531 = vadd.f32 %v1166, %v1423
    %v1532 = vadd.f32 %v1171, %v1423
    %v1533 = vadd.f32 %v1176, %v1423
    %v1534 = vadd.f32 %v1181, %v1423
    %v1535 = vadd.f32 %v1186, %v1423
    %v1536 = vadd.f32 %v1191, %v1427
    %v1537 = vadd.f32 %v1196, %v1427
    %v1538 = vadd.f32 %v1201, %v1427
    %v1539 = vadd.f32 %v1206, %v1427
    %v1540 = vadd.f32 %v1211, %v1427
    %v1541 = vadd.f32 %v1216, %v1427
    %v1542 = vadd.f32 %v1221, %v1427
    %v1543 = vadd.f32 %v1226, %v1427
    %v1544 = vadd.f32 %v1231, %v1427
    %v1545 = vadd.f32 %v1236, %v1427
    %v1546 = vadd.f32 %v1241, %v1427
    %v1547 = vadd.f32 %v1246, %v1427
    %v1548 = vadd.f32 %v1251, %v1427
    %v1549 = vadd.f32 %v1256, %v1427
    %v1550 = vadd.f32 %v1261, %v1427
    %v1551 = vadd.f32 %v1266, %v1427
    %v1552 = vadd.f32 %v1271, %v1431
    %v1553 = vadd.f32 %v1276, %v1431
    %v1554 = vadd.f32 %v1281, %v1431
    %v1555 = vadd.f32 %v1286, %v1431
    %v1556 = vadd.f32 %v1291, %v1431
    %v1557 = vadd.f32 %v1296, %v1431
    %v1558 = vadd.f32 %v1301, %v1431
    %v1559 = vadd.f32 %v1306, %v1431
    %v1560 = vadd.f32 %v1311, %v1431
    %v1561 = vadd.f32 %v1316, %v1431
    %v1562 = vadd.f32 %v1321, %v1431
    %v1563 = vadd.f32 %v1326, %v1431
    %v1564 = vadd.f32 %v1331, %v1431
    %v1565 = vadd.f32 %v1336, %v1431
    %v1566 = vadd.f32 %v1341, %v1431
    %v1567 = vadd.f32 %v1346, %v1431
    %v1568 = vtanh.pop %v1440
    %v1569 = vtanh.pop %v1441
    %v1570 = vtanh.pop %v1442
    %v1571 = vtanh.pop %v1443
    %v1572 = vtanh.pop %v1444
    %v1573 = vtanh.pop %v1445
    %v1574 = vtanh.pop %v1446
    %v1575 = vtanh.pop %v1447
    %v1576 = vtanh.pop %v1448
    %v1577 = vtanh.pop %v1449
    %v1578 = vtanh.pop %v1450
    %v1579 = vtanh.pop %v1451
    %v1580 = vtanh.pop %v1452
    %v1581 = vtanh.pop %v1453
    %v1582 = vtanh.pop %v1454
    %v1583 = vtanh.pop %v1455
    %v1584 = vtanh.pop %v1456
    %v1585 = vtanh.pop %v1457
    %v1586 = vtanh.pop %v1458
    %v1587 = vtanh.pop %v1459
    %v1588 = vtanh.pop %v1460
    %v1589 = vtanh.pop %v1461
    %v1590 = vtanh.pop %v1462
    %v1591 = vtanh.pop %v1463
    %v1592 = vtanh.pop %v1464
    %v1593 = vtanh.pop %v1465
    %v1594 = vtanh.pop %v1466
    %v1595 = vtanh.pop %v1467
    %v1596 = vtanh.pop %v1468
    %v1597 = vtanh.pop %v1469
    %v1598 = vtanh.pop %v1470
    %v1599 = vtanh.pop %v1471
    %v1600 = vtanh.pop %v1472
    %v1601 = vtanh.pop %v1473
    %v1602 = vtanh.pop %v1474
    %v1603 = vtanh.pop %v1475
    %v1604 = vtanh.pop %v1476
    %v1605 = vtanh.pop %v1477
    %v1606 = vtanh.pop %v1478
    %v1607 = vtanh.pop %v1479
    %v1608 = vtanh.pop %v1480
    %v1609 = vtanh.pop %v1481
    %v1610 = vtanh.pop %v1482
    %v1611 = vtanh.pop %v1483
    %v1612 = vtanh.pop %v1484
    %v1613 = vtanh.pop %v1485
    %v1614 = vtanh.pop %v1486
    %v1615 = vtanh.pop %v1487
    %v1616 = vtanh.pop %v1488
    %v1617 = vtanh.pop %v1489
    %v1618 = vtanh.pop %v1490
    %v1619 = vtanh.pop %v1491
    %v1620 = vtanh.pop %v1492
    %v1621 = vtanh.pop %v1493
    %v1622 = vtanh.pop %v1494
    %v1623 = vtanh.pop %v1495
    %v1624 = vtanh.pop %v1496
    %v1625 = vtanh.pop %v1497
    %v1626 = vtanh.pop %v1498
    %v1627 = vtanh.pop %v1499
    %v1628 = vtanh.pop %v1500
    %v1629 = vtanh.pop %v1501
    %v1630 = vtanh.pop %v1502
    %v1631 = vtanh.pop %v1503
    %v1632 = vtanh.pop %v1504
    %v1633 = vtanh.pop %v1505
    %v1634 = vtanh.pop %v1506
    %v1635 = vtanh.pop %v1507
    %v1636 = vtanh.pop %v1508
    %v1637 = vtanh.pop %v1509
    %v1638 = vtanh.pop %v1510
    %v1639 = vtanh.pop %v1511
    %v1640 = vtanh.pop %v1512
    %v1641 = vtanh.pop %v1513
    %v1642 = vtanh.pop %v1514
    %v1643 = vtanh.pop %v1515
    %v1644 = vtanh.pop %v1516
    %v1645 = vtanh.pop %v1517
    %v1646 = vtanh.pop %v1518
    %v1647 = vtanh.pop %v1519
    %v1648 = vtanh.pop %v1520
    %v1649 = vtanh.pop %v1521
    %v1650 = vtanh.pop %v1522
    %v1651 = vtanh.pop %v1523
    %v1652 = vtanh.pop %v1524
    %v1653 = vtanh.pop %v1525
    %v1654 = vtanh.pop %v1526
    %v1655 = vtanh.pop %v1527
    %v1656 = vtanh.pop %v1528
    %v1657 = vtanh.pop %v1529
    %v1658 = vtanh.pop %v1530
    %v1659 = vtanh.pop %v1531
    %v1660 = vtanh.pop %v1532
    %v1661 = vtanh.pop %v1533
    %v1662 = vtanh.pop %v1534
    %v1663 = vtanh.pop %v1535
    %v1664 = vtanh.pop %v1536
    %v1665 = vtanh.pop %v1537
    %v1666 = vtanh.pop %v1538
    %v1667 = vtanh.pop %v1539
    %v1668 = vtanh.pop %v1540
    %v1669 = vtanh.pop %v1541
    %v1670 = vtanh.pop %v1542
    %v1671 = vtanh.pop %v1543
    %v1672 = vtanh.pop %v1544
    %v1673 = vtanh.pop %v1545
    %v1674 = vtanh.pop %v1546
    %v1675 = vtanh.pop %v1547
    %v1676 = vtanh.pop %v1548
    %v1677 = vtanh.pop %v1549
    %v1678 = vtanh.pop %v1550
    %v1679 = vtanh.pop %v1551
    %v1680 = vtanh.pop %v1552
    %v1681 = vtanh.pop %v1553
    %v1682 = vtanh.pop %v1554
    %v1683 = vtanh.pop %v1555
    %v1684 = vtanh.pop %v1556
    %v1685 = vtanh.pop %v1557
    %v1686 = vtanh.pop %v1558
    %v1687 = vtanh.pop %v1559
    %v1688 = vtanh.pop %v1560
    %v1689 = vtanh.pop %v1561
    %v1690 = vtanh.pop %v1562
    %v1691 = vtanh.pop %v1563
    %v1692 = vtanh.pop %v1564
    %v1693 = vtanh.pop %v1565
    %v1694 = vtanh.pop %v1566
    %v1695 = vtanh.pop %v1567
    %v1696 = vld [vmem:[%s5] sm:$0x1]
    %v1698 = vlaneseq
    %v1699 = vshrl.u32 %v1698, 7
    %v1700 = vsub.s32 0, %v1699
    %v1701 = vrot.slane %v1696, %v1700
    %v1703 = vmul.f32 %v1568, %v1701
    %v1704 = vmul.f32 %v1569, %v1701
    %v1705 = vmul.f32 %v1570, %v1701
    %v1706 = vmul.f32 %v1571, %v1701
    %v1707 = vmul.f32 %v1572, %v1701
    %v1708 = vmul.f32 %v1573, %v1701
    %v1709 = vmul.f32 %v1574, %v1701
    %v1710 = vmul.f32 %v1575, %v1701
    %v1711 = vmul.f32 %v1576, %v1701
    %v1712 = vmul.f32 %v1577, %v1701
    %v1713 = vmul.f32 %v1578, %v1701
    %v1714 = vmul.f32 %v1579, %v1701
    %v1715 = vmul.f32 %v1580, %v1701
    %v1716 = vmul.f32 %v1581, %v1701
    %v1717 = vmul.f32 %v1582, %v1701
    %v1718 = vmul.f32 %v1583, %v1701
    %v1719 = vmul.f32 %v1584, %v1701
    %v1720 = vmul.f32 %v1585, %v1701
    %v1721 = vmul.f32 %v1586, %v1701
    %v1722 = vmul.f32 %v1587, %v1701
    %v1723 = vmul.f32 %v1588, %v1701
    %v1724 = vmul.f32 %v1589, %v1701
    %v1725 = vmul.f32 %v1590, %v1701
    %v1726 = vmul.f32 %v1591, %v1701
    %v1727 = vmul.f32 %v1592, %v1701
    %v1728 = vmul.f32 %v1593, %v1701
    %v1729 = vmul.f32 %v1594, %v1701
    %v1730 = vmul.f32 %v1595, %v1701
    %v1731 = vmul.f32 %v1596, %v1701
    %v1732 = vmul.f32 %v1597, %v1701
    %v1733 = vmul.f32 %v1598, %v1701
    %v1734 = vmul.f32 %v1599, %v1701
    %v1735 = vmul.f32 %v1600, %v1701
    %v1736 = vmul.f32 %v1601, %v1701
    %v1737 = vmul.f32 %v1602, %v1701
    %v1738 = vmul.f32 %v1603, %v1701
    %v1739 = vmul.f32 %v1604, %v1701
    %v1740 = vmul.f32 %v1605, %v1701
    %v1741 = vmul.f32 %v1606, %v1701
    %v1742 = vmul.f32 %v1607, %v1701
    %v1743 = vmul.f32 %v1608, %v1701
    %v1744 = vmul.f32 %v1609, %v1701
    %v1745 = vmul.f32 %v1610, %v1701
    %v1746 = vmul.f32 %v1611, %v1701
    %v1747 = vmul.f32 %v1612, %v1701
    %v1748 = vmul.f32 %v1613, %v1701
    %v1749 = vmul.f32 %v1614, %v1701
    %v1750 = vmul.f32 %v1615, %v1701
    %v1751 = vmul.f32 %v1616, %v1701
    %v1752 = vmul.f32 %v1617, %v1701
    %v1753 = vmul.f32 %v1618, %v1701
    %v1754 = vmul.f32 %v1619, %v1701
    %v1755 = vmul.f32 %v1620, %v1701
    %v1756 = vmul.f32 %v1621, %v1701
    %v1757 = vmul.f32 %v1622, %v1701
    %v1758 = vmul.f32 %v1623, %v1701
    %v1759 = vmul.f32 %v1624, %v1701
    %v1760 = vmul.f32 %v1625, %v1701
    %v1761 = vmul.f32 %v1626, %v1701
    %v1762 = vmul.f32 %v1627, %v1701
    %v1763 = vmul.f32 %v1628, %v1701
    %v1764 = vmul.f32 %v1629, %v1701
    %v1765 = vmul.f32 %v1630, %v1701
    %v1766 = vmul.f32 %v1631, %v1701
    %v1767 = vmul.f32 %v1632, %v1701
    %v1768 = vmul.f32 %v1633, %v1701
    %v1769 = vmul.f32 %v1634, %v1701
    %v1770 = vmul.f32 %v1635, %v1701
    %v1771 = vmul.f32 %v1636, %v1701
    %v1772 = vmul.f32 %v1637, %v1701
    %v1773 = vmul.f32 %v1638, %v1701
    %v1774 = vmul.f32 %v1639, %v1701
    %v1775 = vmul.f32 %v1640, %v1701
    %v1776 = vmul.f32 %v1641, %v1701
    %v1777 = vmul.f32 %v1642, %v1701
    %v1778 = vmul.f32 %v1643, %v1701
    %v1779 = vmul.f32 %v1644, %v1701
    %v1780 = vmul.f32 %v1645, %v1701
    %v1781 = vmul.f32 %v1646, %v1701
    %v1782 = vmul.f32 %v1647, %v1701
    %v1783 = vmul.f32 %v1648, %v1701
    %v1784 = vmul.f32 %v1649, %v1701
    %v1785 = vmul.f32 %v1650, %v1701
    %v1786 = vmul.f32 %v1651, %v1701
    %v1787 = vmul.f32 %v1652, %v1701
    %v1788 = vmul.f32 %v1653, %v1701
    %v1789 = vmul.f32 %v1654, %v1701
    %v1790 = vmul.f32 %v1655, %v1701
    %v1791 = vmul.f32 %v1656, %v1701
    %v1792 = vmul.f32 %v1657, %v1701
    %v1793 = vmul.f32 %v1658, %v1701
    %v1794 = vmul.f32 %v1659, %v1701
    %v1795 = vmul.f32 %v1660, %v1701
    %v1796 = vmul.f32 %v1661, %v1701
    %v1797 = vmul.f32 %v1662, %v1701
    %v1798 = vmul.f32 %v1663, %v1701
    %v1799 = vmul.f32 %v1664, %v1701
    %v1800 = vmul.f32 %v1665, %v1701
    %v1801 = vmul.f32 %v1666, %v1701
    %v1802 = vmul.f32 %v1667, %v1701
    %v1803 = vmul.f32 %v1668, %v1701
    %v1804 = vmul.f32 %v1669, %v1701
    %v1805 = vmul.f32 %v1670, %v1701
    %v1806 = vmul.f32 %v1671, %v1701
    %v1807 = vmul.f32 %v1672, %v1701
    %v1808 = vmul.f32 %v1673, %v1701
    %v1809 = vmul.f32 %v1674, %v1701
    %v1810 = vmul.f32 %v1675, %v1701
    %v1811 = vmul.f32 %v1676, %v1701
    %v1812 = vmul.f32 %v1677, %v1701
    %v1813 = vmul.f32 %v1678, %v1701
    %v1814 = vmul.f32 %v1679, %v1701
    %v1815 = vmul.f32 %v1680, %v1701
    %v1816 = vmul.f32 %v1681, %v1701
    %v1817 = vmul.f32 %v1682, %v1701
    %v1818 = vmul.f32 %v1683, %v1701
    %v1819 = vmul.f32 %v1684, %v1701
    %v1820 = vmul.f32 %v1685, %v1701
    %v1821 = vmul.f32 %v1686, %v1701
    %v1822 = vmul.f32 %v1687, %v1701
    %v1823 = vmul.f32 %v1688, %v1701
    %v1824 = vmul.f32 %v1689, %v1701
    %v1825 = vmul.f32 %v1690, %v1701
    %v1826 = vmul.f32 %v1691, %v1701
    %v1827 = vmul.f32 %v1692, %v1701
    %v1828 = vmul.f32 %v1693, %v1701
    %v1829 = vmul.f32 %v1694, %v1701
    %v1830 = vmul.f32 %v1695, %v1701
    %1831 = vadd.xlane.f32.xlu0 %v1703
    %v1832 = vpop.xlane.xlu0 %1831
    %1833 = vadd.xlane.f32.xlu0 %v1704
    %v1834 = vpop.xlane.xlu0 %1833
    %1835 = vadd.xlane.f32.xlu0 %v1705
    %v1836 = vpop.xlane.xlu0 %1835
    %1837 = vadd.xlane.f32.xlu0 %v1706
    %v1838 = vpop.xlane.xlu0 %1837
    %1839 = vadd.xlane.f32.xlu0 %v1707
    %v1840 = vpop.xlane.xlu0 %1839
    %1841 = vadd.xlane.f32.xlu0 %v1708
    %v1842 = vpop.xlane.xlu0 %1841
    %1843 = vadd.xlane.f32.xlu0 %v1709
    %v1844 = vpop.xlane.xlu0 %1843
    %1845 = vadd.xlane.f32.xlu0 %v1710
    %v1846 = vpop.xlane.xlu0 %1845
    %1847 = vadd.xlane.f32.xlu0 %v1711
    %v1848 = vpop.xlane.xlu0 %1847
    %1849 = vadd.xlane.f32.xlu0 %v1712
    %v1850 = vpop.xlane.xlu0 %1849
    %1851 = vadd.xlane.f32.xlu0 %v1713
    %v1852 = vpop.xlane.xlu0 %1851
    %1853 = vadd.xlane.f32.xlu0 %v1714
    %v1854 = vpop.xlane.xlu0 %1853
    %1855 = vadd.xlane.f32.xlu0 %v1715
    %v1856 = vpop.xlane.xlu0 %1855
    %1857 = vadd.xlane.f32.xlu0 %v1716
    %v1858 = vpop.xlane.xlu0 %1857
    %1859 = vadd.xlane.f32.xlu0 %v1717
    %v1860 = vpop.xlane.xlu0 %1859
    %1861 = vadd.xlane.f32.xlu0 %v1718
    %v1862 = vpop.xlane.xlu0 %1861
    %1863 = vadd.xlane.f32.xlu0 %v1719
    %v1864 = vpop.xlane.xlu0 %1863
    %1865 = vadd.xlane.f32.xlu0 %v1720
    %v1866 = vpop.xlane.xlu0 %1865
    %1867 = vadd.xlane.f32.xlu0 %v1721
    %v1868 = vpop.xlane.xlu0 %1867
    %1869 = vadd.xlane.f32.xlu0 %v1722
    %v1870 = vpop.xlane.xlu0 %1869
    %1871 = vadd.xlane.f32.xlu0 %v1723
    %v1872 = vpop.xlane.xlu0 %1871
    %1873 = vadd.xlane.f32.xlu0 %v1724
    %v1874 = vpop.xlane.xlu0 %1873
    %1875 = vadd.xlane.f32.xlu0 %v1725
    %v1876 = vpop.xlane.xlu0 %1875
    %1877 = vadd.xlane.f32.xlu0 %v1726
    %v1878 = vpop.xlane.xlu0 %1877
    %1879 = vadd.xlane.f32.xlu0 %v1727
    %v1880 = vpop.xlane.xlu0 %1879
    %1881 = vadd.xlane.f32.xlu0 %v1728
    %v1882 = vpop.xlane.xlu0 %1881
    %1883 = vadd.xlane.f32.xlu0 %v1729
    %v1884 = vpop.xlane.xlu0 %1883
    %1885 = vadd.xlane.f32.xlu0 %v1730
    %v1886 = vpop.xlane.xlu0 %1885
    %1887 = vadd.xlane.f32.xlu0 %v1731
    %v1888 = vpop.xlane.xlu0 %1887
    %1889 = vadd.xlane.f32.xlu0 %v1732
    %v1890 = vpop.xlane.xlu0 %1889
    %1891 = vadd.xlane.f32.xlu0 %v1733
    %v1892 = vpop.xlane.xlu0 %1891
    %1893 = vadd.xlane.f32.xlu0 %v1734
    %v1894 = vpop.xlane.xlu0 %1893
    %1895 = vadd.xlane.f32.xlu0 %v1735
    %v1896 = vpop.xlane.xlu0 %1895
    %1897 = vadd.xlane.f32.xlu0 %v1736
    %v1898 = vpop.xlane.xlu0 %1897
    %1899 = vadd.xlane.f32.xlu0 %v1737
    %v1900 = vpop.xlane.xlu0 %1899
    %1901 = vadd.xlane.f32.xlu0 %v1738
    %v1902 = vpop.xlane.xlu0 %1901
    %1903 = vadd.xlane.f32.xlu0 %v1739
    %v1904 = vpop.xlane.xlu0 %1903
    %1905 = vadd.xlane.f32.xlu0 %v1740
    %v1906 = vpop.xlane.xlu0 %1905
    %1907 = vadd.xlane.f32.xlu0 %v1741
    %v1908 = vpop.xlane.xlu0 %1907
    %1909 = vadd.xlane.f32.xlu0 %v1742
    %v1910 = vpop.xlane.xlu0 %1909
    %1911 = vadd.xlane.f32.xlu0 %v1743
    %v1912 = vpop.xlane.xlu0 %1911
    %1913 = vadd.xlane.f32.xlu0 %v1744
    %v1914 = vpop.xlane.xlu0 %1913
    %1915 = vadd.xlane.f32.xlu0 %v1745
    %v1916 = vpop.xlane.xlu0 %1915
    %1917 = vadd.xlane.f32.xlu0 %v1746
    %v1918 = vpop.xlane.xlu0 %1917
    %1919 = vadd.xlane.f32.xlu0 %v1747
    %v1920 = vpop.xlane.xlu0 %1919
    %1921 = vadd.xlane.f32.xlu0 %v1748
    %v1922 = vpop.xlane.xlu0 %1921
    %1923 = vadd.xlane.f32.xlu0 %v1749
    %v1924 = vpop.xlane.xlu0 %1923
    %1925 = vadd.xlane.f32.xlu0 %v1750
    %v1926 = vpop.xlane.xlu0 %1925
    %1927 = vadd.xlane.f32.xlu0 %v1751
    %v1928 = vpop.xlane.xlu0 %1927
    %1929 = vadd.xlane.f32.xlu0 %v1752
    %v1930 = vpop.xlane.xlu0 %1929
    %1931 = vadd.xlane.f32.xlu0 %v1753
    %v1932 = vpop.xlane.xlu0 %1931
    %1933 = vadd.xlane.f32.xlu0 %v1754
    %v1934 = vpop.xlane.xlu0 %1933
    %1935 = vadd.xlane.f32.xlu0 %v1755
    %v1936 = vpop.xlane.xlu0 %1935
    %1937 = vadd.xlane.f32.xlu0 %v1756
    %v1938 = vpop.xlane.xlu0 %1937
    %1939 = vadd.xlane.f32.xlu0 %v1757
    %v1940 = vpop.xlane.xlu0 %1939
    %1941 = vadd.xlane.f32.xlu0 %v1758
    %v1942 = vpop.xlane.xlu0 %1941
    %1943 = vadd.xlane.f32.xlu0 %v1759
    %v1944 = vpop.xlane.xlu0 %1943
    %1945 = vadd.xlane.f32.xlu0 %v1760
    %v1946 = vpop.xlane.xlu0 %1945
    %1947 = vadd.xlane.f32.xlu0 %v1761
    %v1948 = vpop.xlane.xlu0 %1947
    %1949 = vadd.xlane.f32.xlu0 %v1762
    %v1950 = vpop.xlane.xlu0 %1949
    %1951 = vadd.xlane.f32.xlu0 %v1763
    %v1952 = vpop.xlane.xlu0 %1951
    %1953 = vadd.xlane.f32.xlu0 %v1764
    %v1954 = vpop.xlane.xlu0 %1953
    %1955 = vadd.xlane.f32.xlu0 %v1765
    %v1956 = vpop.xlane.xlu0 %1955
    %1957 = vadd.xlane.f32.xlu0 %v1766
    %v1958 = vpop.xlane.xlu0 %1957
    %1959 = vadd.xlane.f32.xlu0 %v1767
    %v1960 = vpop.xlane.xlu0 %1959
    %1961 = vadd.xlane.f32.xlu0 %v1768
    %v1962 = vpop.xlane.xlu0 %1961
    %1963 = vadd.xlane.f32.xlu0 %v1769
    %v1964 = vpop.xlane.xlu0 %1963
    %1965 = vadd.xlane.f32.xlu0 %v1770
    %v1966 = vpop.xlane.xlu0 %1965
    %1967 = vadd.xlane.f32.xlu0 %v1771
    %v1968 = vpop.xlane.xlu0 %1967
    %1969 = vadd.xlane.f32.xlu0 %v1772
    %v1970 = vpop.xlane.xlu0 %1969
    %1971 = vadd.xlane.f32.xlu0 %v1773
    %v1972 = vpop.xlane.xlu0 %1971
    %1973 = vadd.xlane.f32.xlu0 %v1774
    %v1974 = vpop.xlane.xlu0 %1973
    %1975 = vadd.xlane.f32.xlu0 %v1775
    %v1976 = vpop.xlane.xlu0 %1975
    %1977 = vadd.xlane.f32.xlu0 %v1776
    %v1978 = vpop.xlane.xlu0 %1977
    %1979 = vadd.xlane.f32.xlu0 %v1777
    %v1980 = vpop.xlane.xlu0 %1979
    %1981 = vadd.xlane.f32.xlu0 %v1778
    %v1982 = vpop.xlane.xlu0 %1981
    %1983 = vadd.xlane.f32.xlu0 %v1779
    %v1984 = vpop.xlane.xlu0 %1983
    %1985 = vadd.xlane.f32.xlu0 %v1780
    %v1986 = vpop.xlane.xlu0 %1985
    %1987 = vadd.xlane.f32.xlu0 %v1781
    %v1988 = vpop.xlane.xlu0 %1987
    %1989 = vadd.xlane.f32.xlu0 %v1782
    %v1990 = vpop.xlane.xlu0 %1989
    %1991 = vadd.xlane.f32.xlu0 %v1783
    %v1992 = vpop.xlane.xlu0 %1991
    %1993 = vadd.xlane.f32.xlu0 %v1784
    %v1994 = vpop.xlane.xlu0 %1993
    %1995 = vadd.xlane.f32.xlu0 %v1785
    %v1996 = vpop.xlane.xlu0 %1995
    %1997 = vadd.xlane.f32.xlu0 %v1786
    %v1998 = vpop.xlane.xlu0 %1997
    %1999 = vadd.xlane.f32.xlu0 %v1787
    %v2000 = vpop.xlane.xlu0 %1999
    %2001 = vadd.xlane.f32.xlu0 %v1788
    %v2002 = vpop.xlane.xlu0 %2001
    %2003 = vadd.xlane.f32.xlu0 %v1789
    %v2004 = vpop.xlane.xlu0 %2003
    %2005 = vadd.xlane.f32.xlu0 %v1790
    %v2006 = vpop.xlane.xlu0 %2005
    %2007 = vadd.xlane.f32.xlu0 %v1791
    %v2008 = vpop.xlane.xlu0 %2007
    %2009 = vadd.xlane.f32.xlu0 %v1792
    %v2010 = vpop.xlane.xlu0 %2009
    %2011 = vadd.xlane.f32.xlu0 %v1793
    %v2012 = vpop.xlane.xlu0 %2011
    %2013 = vadd.xlane.f32.xlu0 %v1794
    %v2014 = vpop.xlane.xlu0 %2013
    %2015 = vadd.xlane.f32.xlu0 %v1795
    %v2016 = vpop.xlane.xlu0 %2015
    %2017 = vadd.xlane.f32.xlu0 %v1796
    %v2018 = vpop.xlane.xlu0 %2017
    %2019 = vadd.xlane.f32.xlu0 %v1797
    %v2020 = vpop.xlane.xlu0 %2019
    %2021 = vadd.xlane.f32.xlu0 %v1798
    %v2022 = vpop.xlane.xlu0 %2021
    %2023 = vadd.xlane.f32.xlu0 %v1799
    %v2024 = vpop.xlane.xlu0 %2023
    %2025 = vadd.xlane.f32.xlu0 %v1800
    %v2026 = vpop.xlane.xlu0 %2025
    %2027 = vadd.xlane.f32.xlu0 %v1801
    %v2028 = vpop.xlane.xlu0 %2027
    %2029 = vadd.xlane.f32.xlu0 %v1802
    %v2030 = vpop.xlane.xlu0 %2029
    %2031 = vadd.xlane.f32.xlu0 %v1803
    %v2032 = vpop.xlane.xlu0 %2031
    %2033 = vadd.xlane.f32.xlu0 %v1804
    %v2034 = vpop.xlane.xlu0 %2033
    %2035 = vadd.xlane.f32.xlu0 %v1805
    %v2036 = vpop.xlane.xlu0 %2035
    %2037 = vadd.xlane.f32.xlu0 %v1806
    %v2038 = vpop.xlane.xlu0 %2037
    %2039 = vadd.xlane.f32.xlu0 %v1807
    %v2040 = vpop.xlane.xlu0 %2039
    %2041 = vadd.xlane.f32.xlu0 %v1808
    %v2042 = vpop.xlane.xlu0 %2041
    %2043 = vadd.xlane.f32.xlu0 %v1809
    %v2044 = vpop.xlane.xlu0 %2043
    %2045 = vadd.xlane.f32.xlu0 %v1810
    %v2046 = vpop.xlane.xlu0 %2045
    %2047 = vadd.xlane.f32.xlu0 %v1811
    %v2048 = vpop.xlane.xlu0 %2047
    %2049 = vadd.xlane.f32.xlu0 %v1812
    %v2050 = vpop.xlane.xlu0 %2049
    %2051 = vadd.xlane.f32.xlu0 %v1813
    %v2052 = vpop.xlane.xlu0 %2051
    %2053 = vadd.xlane.f32.xlu0 %v1814
    %v2054 = vpop.xlane.xlu0 %2053
    %2055 = vadd.xlane.f32.xlu0 %v1815
    %v2056 = vpop.xlane.xlu0 %2055
    %2057 = vadd.xlane.f32.xlu0 %v1816
    %v2058 = vpop.xlane.xlu0 %2057
    %2059 = vadd.xlane.f32.xlu0 %v1817
    %v2060 = vpop.xlane.xlu0 %2059
    %2061 = vadd.xlane.f32.xlu0 %v1818
    %v2062 = vpop.xlane.xlu0 %2061
    %2063 = vadd.xlane.f32.xlu0 %v1819
    %v2064 = vpop.xlane.xlu0 %2063
    %2065 = vadd.xlane.f32.xlu0 %v1820
    %v2066 = vpop.xlane.xlu0 %2065
    %2067 = vadd.xlane.f32.xlu0 %v1821
    %v2068 = vpop.xlane.xlu0 %2067
    %2069 = vadd.xlane.f32.xlu0 %v1822
    %v2070 = vpop.xlane.xlu0 %2069
    %2071 = vadd.xlane.f32.xlu0 %v1823
    %v2072 = vpop.xlane.xlu0 %2071
    %2073 = vadd.xlane.f32.xlu0 %v1824
    %v2074 = vpop.xlane.xlu0 %2073
    %2075 = vadd.xlane.f32.xlu0 %v1825
    %v2076 = vpop.xlane.xlu0 %2075
    %2077 = vadd.xlane.f32.xlu0 %v1826
    %v2078 = vpop.xlane.xlu0 %2077
    %2079 = vadd.xlane.f32.xlu0 %v1827
    %v2080 = vpop.xlane.xlu0 %2079
    %2081 = vadd.xlane.f32.xlu0 %v1828
    %v2082 = vpop.xlane.xlu0 %2081
    %2083 = vadd.xlane.f32.xlu0 %v1829
    %v2084 = vpop.xlane.xlu0 %2083
    %2085 = vadd.xlane.f32.xlu0 %v1830
    %v2086 = vpop.xlane.xlu0 %2085
    %s2087 = smul.u32 0, 128
    %v2216 = vlaneseq
    %v2217 = vand.u32 %v2216, 127
    %v2218 = vlaneseq
    %v2219 = vshrl.u32 %v2218, 7
    %v2220 = vsub.s32 %v2217, %v2219
    %v2221 = vrot.slane %v1832, %v2220
    %v2222 = vadd.s32 %v2217, 4294967288
    %v2223 = vlaneseq
    %v2224 = vshrl.u32 %v2223, 7
    %v2225 = vsub.s32 %v2222, %v2224
    %v2226 = vrot.slane %v1834, %v2225
    %vm2227 = vcmask 130112
    %v2228 = vsel %vm2227, %v2226, %v2221
    %v2229 = vadd.s32 %v2217, 4294967280
    %v2230 = vlaneseq
    %v2231 = vshrl.u32 %v2230, 7
    %v2232 = vsub.s32 %v2229, %v2231
    %v2233 = vrot.slane %v1836, %v2232
    %vm2234 = vcmask 195712
    %v2235 = vsel %vm2234, %v2233, %v2228
    %v2236 = vadd.s32 %v2217, 4294967272
    %v2237 = vlaneseq
    %v2238 = vshrl.u32 %v2237, 7
    %v2239 = vsub.s32 %v2236, %v2238
    %v2240 = vrot.slane %v1838, %v2239
    %vm2241 = vcmask 261312
    %v2242 = vsel %vm2241, %v2240, %v2235
    %v2243 = vadd.s32 %v2217, 4294967264
    %v2244 = vlaneseq
    %v2245 = vshrl.u32 %v2244, 7
    %v2246 = vsub.s32 %v2243, %v2245
    %v2247 = vrot.slane %v1840, %v2246
    %vm2248 = vcmask 326912
    %v2249 = vsel %vm2248, %v2247, %v2242
    %v2250 = vadd.s32 %v2217, 4294967256
    %v2251 = vlaneseq
    %v2252 = vshrl.u32 %v2251, 7
    %v2253 = vsub.s32 %v2250, %v2252
    %v2254 = vrot.slane %v1842, %v2253
    %vm2255 = vcmask 392512
    %v2256 = vsel %vm2255, %v2254, %v2249
    %v2257 = vadd.s32 %v2217, 4294967248
    %v2258 = vlaneseq
    %v2259 = vshrl.u32 %v2258, 7
    %v2260 = vsub.s32 %v2257, %v2259
    %v2261 = vrot.slane %v1844, %v2260
    %vm2262 = vcmask 458112
    %v2263 = vsel %vm2262, %v2261, %v2256
    %v2264 = vadd.s32 %v2217, 4294967240
    %v2265 = vlaneseq
    %v2266 = vshrl.u32 %v2265, 7
    %v2267 = vsub.s32 %v2264, %v2266
    %v2268 = vrot.slane %v1846, %v2267
    %vm2269 = vcmask 523712
    %v2270 = vsel %vm2269, %v2268, %v2263
    %v2271 = vadd.s32 %v2217, 4294967232
    %v2272 = vlaneseq
    %v2273 = vshrl.u32 %v2272, 7
    %v2274 = vsub.s32 %v2271, %v2273
    %v2275 = vrot.slane %v1848, %v2274
    %vm2276 = vcmask 589312
    %v2277 = vsel %vm2276, %v2275, %v2270
    %v2278 = vadd.s32 %v2217, 4294967224
    %v2279 = vlaneseq
    %v2280 = vshrl.u32 %v2279, 7
    %v2281 = vsub.s32 %v2278, %v2280
    %v2282 = vrot.slane %v1850, %v2281
    %vm2283 = vcmask 654912
    %v2284 = vsel %vm2283, %v2282, %v2277
    %v2285 = vadd.s32 %v2217, 4294967216
    %v2286 = vlaneseq
    %v2287 = vshrl.u32 %v2286, 7
    %v2288 = vsub.s32 %v2285, %v2287
    %v2289 = vrot.slane %v1852, %v2288
    %vm2290 = vcmask 720512
    %v2291 = vsel %vm2290, %v2289, %v2284
    %v2292 = vadd.s32 %v2217, 4294967208
    %v2293 = vlaneseq
    %v2294 = vshrl.u32 %v2293, 7
    %v2295 = vsub.s32 %v2292, %v2294
    %v2296 = vrot.slane %v1854, %v2295
    %vm2297 = vcmask 786112
    %v2298 = vsel %vm2297, %v2296, %v2291
    %v2299 = vadd.s32 %v2217, 4294967200
    %v2300 = vlaneseq
    %v2301 = vshrl.u32 %v2300, 7
    %v2302 = vsub.s32 %v2299, %v2301
    %v2303 = vrot.slane %v1856, %v2302
    %vm2304 = vcmask 851712
    %v2305 = vsel %vm2304, %v2303, %v2298
    %v2306 = vadd.s32 %v2217, 4294967192
    %v2307 = vlaneseq
    %v2308 = vshrl.u32 %v2307, 7
    %v2309 = vsub.s32 %v2306, %v2308
    %v2310 = vrot.slane %v1858, %v2309
    %vm2311 = vcmask 917312
    %v2312 = vsel %vm2311, %v2310, %v2305
    %v2313 = vadd.s32 %v2217, 4294967184
    %v2314 = vlaneseq
    %v2315 = vshrl.u32 %v2314, 7
    %v2316 = vsub.s32 %v2313, %v2315
    %v2317 = vrot.slane %v1860, %v2316
    %vm2318 = vcmask 982912
    %v2319 = vsel %vm2318, %v2317, %v2312
    %v2320 = vadd.s32 %v2217, 4294967176
    %v2321 = vlaneseq
    %v2322 = vshrl.u32 %v2321, 7
    %v2323 = vsub.s32 %v2320, %v2322
    %v2324 = vrot.slane %v1862, %v2323
    %vm2325 = vcmask 1048512
    %v2326 = vsel %vm2325, %v2324, %v2319
    %v2327 = vlaneseq
    %v2328 = vshrl.u32 %v2327, 7
    %v2329 = vsub.s32 %v2217, %v2328
    %v2330 = vrot.slane %v1864, %v2329
    %v2331 = vlaneseq
    %v2332 = vshrl.u32 %v2331, 7
    %v2333 = vsub.s32 %v2222, %v2332
    %v2334 = vrot.slane %v1866, %v2333
    %v2335 = vsel %vm2227, %v2334, %v2330
    %v2336 = vlaneseq
    %v2337 = vshrl.u32 %v2336, 7
    %v2338 = vsub.s32 %v2229, %v2337
    %v2339 = vrot.slane %v1868, %v2338
    %v2340 = vsel %vm2234, %v2339, %v2335
    %v2341 = vlaneseq
    %v2342 = vshrl.u32 %v2341, 7
    %v2343 = vsub.s32 %v2236, %v2342
    %v2344 = vrot.slane %v1870, %v2343
    %v2345 = vsel %vm2241, %v2344, %v2340
    %v2346 = vlaneseq
    %v2347 = vshrl.u32 %v2346, 7
    %v2348 = vsub.s32 %v2243, %v2347
    %v2349 = vrot.slane %v1872, %v2348
    %v2350 = vsel %vm2248, %v2349, %v2345
    %v2351 = vlaneseq
    %v2352 = vshrl.u32 %v2351, 7
    %v2353 = vsub.s32 %v2250, %v2352
    %v2354 = vrot.slane %v1874, %v2353
    %v2355 = vsel %vm2255, %v2354, %v2350
    %v2356 = vlaneseq
    %v2357 = vshrl.u32 %v2356, 7
    %v2358 = vsub.s32 %v2257, %v2357
    %v2359 = vrot.slane %v1876, %v2358
    %v2360 = vsel %vm2262, %v2359, %v2355
    %v2361 = vlaneseq
    %v2362 = vshrl.u32 %v2361, 7
    %v2363 = vsub.s32 %v2264, %v2362
    %v2364 = vrot.slane %v1878, %v2363
    %v2365 = vsel %vm2269, %v2364, %v2360
    %v2366 = vlaneseq
    %v2367 = vshrl.u32 %v2366, 7
    %v2368 = vsub.s32 %v2271, %v2367
    %v2369 = vrot.slane %v1880, %v2368
    %v2370 = vsel %vm2276, %v2369, %v2365
    %v2371 = vlaneseq
    %v2372 = vshrl.u32 %v2371, 7
    %v2373 = vsub.s32 %v2278, %v2372
    %v2374 = vrot.slane %v1882, %v2373
    %v2375 = vsel %vm2283, %v2374, %v2370
    %v2376 = vlaneseq
    %v2377 = vshrl.u32 %v2376, 7
    %v2378 = vsub.s32 %v2285, %v2377
    %v2379 = vrot.slane %v1884, %v2378
    %v2380 = vsel %vm2290, %v2379, %v2375
    %v2381 = vlaneseq
    %v2382 = vshrl.u32 %v2381, 7
    %v2383 = vsub.s32 %v2292, %v2382
    %v2384 = vrot.slane %v1886, %v2383
    %v2385 = vsel %vm2297, %v2384, %v2380
    %v2386 = vlaneseq
    %v2387 = vshrl.u32 %v2386, 7
    %v2388 = vsub.s32 %v2299, %v2387
    %v2389 = vrot.slane %v1888, %v2388
    %v2390 = vsel %vm2304, %v2389, %v2385
    %v2391 = vlaneseq
    %v2392 = vshrl.u32 %v2391, 7
    %v2393 = vsub.s32 %v2306, %v2392
    %v2394 = vrot.slane %v1890, %v2393
    %v2395 = vsel %vm2311, %v2394, %v2390
    %v2396 = vlaneseq
    %v2397 = vshrl.u32 %v2396, 7
    %v2398 = vsub.s32 %v2313, %v2397
    %v2399 = vrot.slane %v1892, %v2398
    %v2400 = vsel %vm2318, %v2399, %v2395
    %v2401 = vlaneseq
    %v2402 = vshrl.u32 %v2401, 7
    %v2403 = vsub.s32 %v2320, %v2402
    %v2404 = vrot.slane %v1894, %v2403
    %v2405 = vsel %vm2325, %v2404, %v2400
    %v2406 = vlaneseq
    %v2407 = vshrl.u32 %v2406, 7
    %v2408 = vsub.s32 %v2217, %v2407
    %v2409 = vrot.slane %v1896, %v2408
    %v2410 = vlaneseq
    %v2411 = vshrl.u32 %v2410, 7
    %v2412 = vsub.s32 %v2222, %v2411
    %v2413 = vrot.slane %v1898, %v2412
    %v2414 = vsel %vm2227, %v2413, %v2409
    %v2415 = vlaneseq
    %v2416 = vshrl.u32 %v2415, 7
    %v2417 = vsub.s32 %v2229, %v2416
    %v2418 = vrot.slane %v1900, %v2417
    %v2419 = vsel %vm2234, %v2418, %v2414
    %v2420 = vlaneseq
    %v2421 = vshrl.u32 %v2420, 7
    %v2422 = vsub.s32 %v2236, %v2421
    %v2423 = vrot.slane %v1902, %v2422
    %v2424 = vsel %vm2241, %v2423, %v2419
    %v2425 = vlaneseq
    %v2426 = vshrl.u32 %v2425, 7
    %v2427 = vsub.s32 %v2243, %v2426
    %v2428 = vrot.slane %v1904, %v2427
    %v2429 = vsel %vm2248, %v2428, %v2424
    %v2430 = vlaneseq
    %v2431 = vshrl.u32 %v2430, 7
    %v2432 = vsub.s32 %v2250, %v2431
    %v2433 = vrot.slane %v1906, %v2432
    %v2434 = vsel %vm2255, %v2433, %v2429
    %v2435 = vlaneseq
    %v2436 = vshrl.u32 %v2435, 7
    %v2437 = vsub.s32 %v2257, %v2436
    %v2438 = vrot.slane %v1908, %v2437
    %v2439 = vsel %vm2262, %v2438, %v2434
    %v2440 = vlaneseq
    %v2441 = vshrl.u32 %v2440, 7
    %v2442 = vsub.s32 %v2264, %v2441
    %v2443 = vrot.slane %v1910, %v2442
    %v2444 = vsel %vm2269, %v2443, %v2439
    %v2445 = vlaneseq
    %v2446 = vshrl.u32 %v2445, 7
    %v2447 = vsub.s32 %v2271, %v2446
    %v2448 = vrot.slane %v1912, %v2447
    %v2449 = vsel %vm2276, %v2448, %v2444
    %v2450 = vlaneseq
    %v2451 = vshrl.u32 %v2450, 7
    %v2452 = vsub.s32 %v2278, %v2451
    %v2453 = vrot.slane %v1914, %v2452
    %v2454 = vsel %vm2283, %v2453, %v2449
    %v2455 = vlaneseq
    %v2456 = vshrl.u32 %v2455, 7
    %v2457 = vsub.s32 %v2285, %v2456
    %v2458 = vrot.slane %v1916, %v2457
    %v2459 = vsel %vm2290, %v2458, %v2454
    %v2460 = vlaneseq
    %v2461 = vshrl.u32 %v2460, 7
    %v2462 = vsub.s32 %v2292, %v2461
    %v2463 = vrot.slane %v1918, %v2462
    %v2464 = vsel %vm2297, %v2463, %v2459
    %v2465 = vlaneseq
    %v2466 = vshrl.u32 %v2465, 7
    %v2467 = vsub.s32 %v2299, %v2466
    %v2468 = vrot.slane %v1920, %v2467
    %v2469 = vsel %vm2304, %v2468, %v2464
    %v2470 = vlaneseq
    %v2471 = vshrl.u32 %v2470, 7
    %v2472 = vsub.s32 %v2306, %v2471
    %v2473 = vrot.slane %v1922, %v2472
    %v2474 = vsel %vm2311, %v2473, %v2469
    %v2475 = vlaneseq
    %v2476 = vshrl.u32 %v2475, 7
    %v2477 = vsub.s32 %v2313, %v2476
    %v2478 = vrot.slane %v1924, %v2477
    %v2479 = vsel %vm2318, %v2478, %v2474
    %v2480 = vlaneseq
    %v2481 = vshrl.u32 %v2480, 7
    %v2482 = vsub.s32 %v2320, %v2481
    %v2483 = vrot.slane %v1926, %v2482
    %v2484 = vsel %vm2325, %v2483, %v2479
    %v2485 = vlaneseq
    %v2486 = vshrl.u32 %v2485, 7
    %v2487 = vsub.s32 %v2217, %v2486
    %v2488 = vrot.slane %v1928, %v2487
    %v2489 = vlaneseq
    %v2490 = vshrl.u32 %v2489, 7
    %v2491 = vsub.s32 %v2222, %v2490
    %v2492 = vrot.slane %v1930, %v2491
    %v2493 = vsel %vm2227, %v2492, %v2488
    %v2494 = vlaneseq
    %v2495 = vshrl.u32 %v2494, 7
    %v2496 = vsub.s32 %v2229, %v2495
    %v2497 = vrot.slane %v1932, %v2496
    %v2498 = vsel %vm2234, %v2497, %v2493
    %v2499 = vlaneseq
    %v2500 = vshrl.u32 %v2499, 7
    %v2501 = vsub.s32 %v2236, %v2500
    %v2502 = vrot.slane %v1934, %v2501
    %v2503 = vsel %vm2241, %v2502, %v2498
    %v2504 = vlaneseq
    %v2505 = vshrl.u32 %v2504, 7
    %v2506 = vsub.s32 %v2243, %v2505
    %v2507 = vrot.slane %v1936, %v2506
    %v2508 = vsel %vm2248, %v2507, %v2503
    %v2509 = vlaneseq
    %v2510 = vshrl.u32 %v2509, 7
    %v2511 = vsub.s32 %v2250, %v2510
    %v2512 = vrot.slane %v1938, %v2511
    %v2513 = vsel %vm2255, %v2512, %v2508
    %v2514 = vlaneseq
    %v2515 = vshrl.u32 %v2514, 7
    %v2516 = vsub.s32 %v2257, %v2515
    %v2517 = vrot.slane %v1940, %v2516
    %v2518 = vsel %vm2262, %v2517, %v2513
    %v2519 = vlaneseq
    %v2520 = vshrl.u32 %v2519, 7
    %v2521 = vsub.s32 %v2264, %v2520
    %v2522 = vrot.slane %v1942, %v2521
    %v2523 = vsel %vm2269, %v2522, %v2518
    %v2524 = vlaneseq
    %v2525 = vshrl.u32 %v2524, 7
    %v2526 = vsub.s32 %v2271, %v2525
    %v2527 = vrot.slane %v1944, %v2526
    %v2528 = vsel %vm2276, %v2527, %v2523
    %v2529 = vlaneseq
    %v2530 = vshrl.u32 %v2529, 7
    %v2531 = vsub.s32 %v2278, %v2530
    %v2532 = vrot.slane %v1946, %v2531
    %v2533 = vsel %vm2283, %v2532, %v2528
    %v2534 = vlaneseq
    %v2535 = vshrl.u32 %v2534, 7
    %v2536 = vsub.s32 %v2285, %v2535
    %v2537 = vrot.slane %v1948, %v2536
    %v2538 = vsel %vm2290, %v2537, %v2533
    %v2539 = vlaneseq
    %v2540 = vshrl.u32 %v2539, 7
    %v2541 = vsub.s32 %v2292, %v2540
    %v2542 = vrot.slane %v1950, %v2541
    %v2543 = vsel %vm2297, %v2542, %v2538
    %v2544 = vlaneseq
    %v2545 = vshrl.u32 %v2544, 7
    %v2546 = vsub.s32 %v2299, %v2545
    %v2547 = vrot.slane %v1952, %v2546
    %v2548 = vsel %vm2304, %v2547, %v2543
    %v2549 = vlaneseq
    %v2550 = vshrl.u32 %v2549, 7
    %v2551 = vsub.s32 %v2306, %v2550
    %v2552 = vrot.slane %v1954, %v2551
    %v2553 = vsel %vm2311, %v2552, %v2548
    %v2554 = vlaneseq
    %v2555 = vshrl.u32 %v2554, 7
    %v2556 = vsub.s32 %v2313, %v2555
    %v2557 = vrot.slane %v1956, %v2556
    %v2558 = vsel %vm2318, %v2557, %v2553
    %v2559 = vlaneseq
    %v2560 = vshrl.u32 %v2559, 7
    %v2561 = vsub.s32 %v2320, %v2560
    %v2562 = vrot.slane %v1958, %v2561
    %v2563 = vsel %vm2325, %v2562, %v2558
    %v2564 = vlaneseq
    %v2565 = vshrl.u32 %v2564, 7
    %v2566 = vsub.s32 %v2217, %v2565
    %v2567 = vrot.slane %v1960, %v2566
    %v2568 = vlaneseq
    %v2569 = vshrl.u32 %v2568, 7
    %v2570 = vsub.s32 %v2222, %v2569
    %v2571 = vrot.slane %v1962, %v2570
    %v2572 = vsel %vm2227, %v2571, %v2567
    %v2573 = vlaneseq
    %v2574 = vshrl.u32 %v2573, 7
    %v2575 = vsub.s32 %v2229, %v2574
    %v2576 = vrot.slane %v1964, %v2575
    %v2577 = vsel %vm2234, %v2576, %v2572
    %v2578 = vlaneseq
    %v2579 = vshrl.u32 %v2578, 7
    %v2580 = vsub.s32 %v2236, %v2579
    %v2581 = vrot.slane %v1966, %v2580
    %v2582 = vsel %vm2241, %v2581, %v2577
    %v2583 = vlaneseq
    %v2584 = vshrl.u32 %v2583, 7
    %v2585 = vsub.s32 %v2243, %v2584
    %v2586 = vrot.slane %v1968, %v2585
    %v2587 = vsel %vm2248, %v2586, %v2582
    %v2588 = vlaneseq
    %v2589 = vshrl.u32 %v2588, 7
    %v2590 = vsub.s32 %v2250, %v2589
    %v2591 = vrot.slane %v1970, %v2590
    %v2592 = vsel %vm2255, %v2591, %v2587
    %v2593 = vlaneseq
    %v2594 = vshrl.u32 %v2593, 7
    %v2595 = vsub.s32 %v2257, %v2594
    %v2596 = vrot.slane %v1972, %v2595
    %v2597 = vsel %vm2262, %v2596, %v2592
    %v2598 = vlaneseq
    %v2599 = vshrl.u32 %v2598, 7
    %v2600 = vsub.s32 %v2264, %v2599
    %v2601 = vrot.slane %v1974, %v2600
    %v2602 = vsel %vm2269, %v2601, %v2597
    %v2603 = vlaneseq
    %v2604 = vshrl.u32 %v2603, 7
    %v2605 = vsub.s32 %v2271, %v2604
    %v2606 = vrot.slane %v1976, %v2605
    %v2607 = vsel %vm2276, %v2606, %v2602
    %v2608 = vlaneseq
    %v2609 = vshrl.u32 %v2608, 7
    %v2610 = vsub.s32 %v2278, %v2609
    %v2611 = vrot.slane %v1978, %v2610
    %v2612 = vsel %vm2283, %v2611, %v2607
    %v2613 = vlaneseq
    %v2614 = vshrl.u32 %v2613, 7
    %v2615 = vsub.s32 %v2285, %v2614
    %v2616 = vrot.slane %v1980, %v2615
    %v2617 = vsel %vm2290, %v2616, %v2612
    %v2618 = vlaneseq
    %v2619 = vshrl.u32 %v2618, 7
    %v2620 = vsub.s32 %v2292, %v2619
    %v2621 = vrot.slane %v1982, %v2620
    %v2622 = vsel %vm2297, %v2621, %v2617
    %v2623 = vlaneseq
    %v2624 = vshrl.u32 %v2623, 7
    %v2625 = vsub.s32 %v2299, %v2624
    %v2626 = vrot.slane %v1984, %v2625
    %v2627 = vsel %vm2304, %v2626, %v2622
    %v2628 = vlaneseq
    %v2629 = vshrl.u32 %v2628, 7
    %v2630 = vsub.s32 %v2306, %v2629
    %v2631 = vrot.slane %v1986, %v2630
    %v2632 = vsel %vm2311, %v2631, %v2627
    %v2633 = vlaneseq
    %v2634 = vshrl.u32 %v2633, 7
    %v2635 = vsub.s32 %v2313, %v2634
    %v2636 = vrot.slane %v1988, %v2635
    %v2637 = vsel %vm2318, %v2636, %v2632
    %v2638 = vlaneseq
    %v2639 = vshrl.u32 %v2638, 7
    %v2640 = vsub.s32 %v2320, %v2639
    %v2641 = vrot.slane %v1990, %v2640
    %v2642 = vsel %vm2325, %v2641, %v2637
    %v2643 = vlaneseq
    %v2644 = vshrl.u32 %v2643, 7
    %v2645 = vsub.s32 %v2217, %v2644
    %v2646 = vrot.slane %v1992, %v2645
    %v2647 = vlaneseq
    %v2648 = vshrl.u32 %v2647, 7
    %v2649 = vsub.s32 %v2222, %v2648
    %v2650 = vrot.slane %v1994, %v2649
    %v2651 = vsel %vm2227, %v2650, %v2646
    %v2652 = vlaneseq
    %v2653 = vshrl.u32 %v2652, 7
    %v2654 = vsub.s32 %v2229, %v2653
    %v2655 = vrot.slane %v1996, %v2654
    %v2656 = vsel %vm2234, %v2655, %v2651
    %v2657 = vlaneseq
    %v2658 = vshrl.u32 %v2657, 7
    %v2659 = vsub.s32 %v2236, %v2658
    %v2660 = vrot.slane %v1998, %v2659
    %v2661 = vsel %vm2241, %v2660, %v2656
    %v2662 = vlaneseq
    %v2663 = vshrl.u32 %v2662, 7
    %v2664 = vsub.s32 %v2243, %v2663
    %v2665 = vrot.slane %v2000, %v2664
    %v2666 = vsel %vm2248, %v2665, %v2661
    %v2667 = vlaneseq
    %v2668 = vshrl.u32 %v2667, 7
    %v2669 = vsub.s32 %v2250, %v2668
    %v2670 = vrot.slane %v2002, %v2669
    %v2671 = vsel %vm2255, %v2670, %v2666
    %v2672 = vlaneseq
    %v2673 = vshrl.u32 %v2672, 7
    %v2674 = vsub.s32 %v2257, %v2673
    %v2675 = vrot.slane %v2004, %v2674
    %v2676 = vsel %vm2262, %v2675, %v2671
    %v2677 = vlaneseq
    %v2678 = vshrl.u32 %v2677, 7
    %v2679 = vsub.s32 %v2264, %v2678
    %v2680 = vrot.slane %v2006, %v2679
    %v2681 = vsel %vm2269, %v2680, %v2676
    %v2682 = vlaneseq
    %v2683 = vshrl.u32 %v2682, 7
    %v2684 = vsub.s32 %v2271, %v2683
    %v2685 = vrot.slane %v2008, %v2684
    %v2686 = vsel %vm2276, %v2685, %v2681
    %v2687 = vlaneseq
    %v2688 = vshrl.u32 %v2687, 7
    %v2689 = vsub.s32 %v2278, %v2688
    %v2690 = vrot.slane %v2010, %v2689
    %v2691 = vsel %vm2283, %v2690, %v2686
    %v2692 = vlaneseq
    %v2693 = vshrl.u32 %v2692, 7
    %v2694 = vsub.s32 %v2285, %v2693
    %v2695 = vrot.slane %v2012, %v2694
    %v2696 = vsel %vm2290, %v2695, %v2691
    %v2697 = vlaneseq
    %v2698 = vshrl.u32 %v2697, 7
    %v2699 = vsub.s32 %v2292, %v2698
    %v2700 = vrot.slane %v2014, %v2699
    %v2701 = vsel %vm2297, %v2700, %v2696
    %v2702 = vlaneseq
    %v2703 = vshrl.u32 %v2702, 7
    %v2704 = vsub.s32 %v2299, %v2703
    %v2705 = vrot.slane %v2016, %v2704
    %v2706 = vsel %vm2304, %v2705, %v2701
    %v2707 = vlaneseq
    %v2708 = vshrl.u32 %v2707, 7
    %v2709 = vsub.s32 %v2306, %v2708
    %v2710 = vrot.slane %v2018, %v2709
    %v2711 = vsel %vm2311, %v2710, %v2706
    %v2712 = vlaneseq
    %v2713 = vshrl.u32 %v2712, 7
    %v2714 = vsub.s32 %v2313, %v2713
    %v2715 = vrot.slane %v2020, %v2714
    %v2716 = vsel %vm2318, %v2715, %v2711
    %v2717 = vlaneseq
    %v2718 = vshrl.u32 %v2717, 7
    %v2719 = vsub.s32 %v2320, %v2718
    %v2720 = vrot.slane %v2022, %v2719
    %v2721 = vsel %vm2325, %v2720, %v2716
    %v2722 = vlaneseq
    %v2723 = vshrl.u32 %v2722, 7
    %v2724 = vsub.s32 %v2217, %v2723
    %v2725 = vrot.slane %v2024, %v2724
    %v2726 = vlaneseq
    %v2727 = vshrl.u32 %v2726, 7
    %v2728 = vsub.s32 %v2222, %v2727
    %v2729 = vrot.slane %v2026, %v2728
    %v2730 = vsel %vm2227, %v2729, %v2725
    %v2731 = vlaneseq
    %v2732 = vshrl.u32 %v2731, 7
    %v2733 = vsub.s32 %v2229, %v2732
    %v2734 = vrot.slane %v2028, %v2733
    %v2735 = vsel %vm2234, %v2734, %v2730
    %v2736 = vlaneseq
    %v2737 = vshrl.u32 %v2736, 7
    %v2738 = vsub.s32 %v2236, %v2737
    %v2739 = vrot.slane %v2030, %v2738
    %v2740 = vsel %vm2241, %v2739, %v2735
    %v2741 = vlaneseq
    %v2742 = vshrl.u32 %v2741, 7
    %v2743 = vsub.s32 %v2243, %v2742
    %v2744 = vrot.slane %v2032, %v2743
    %v2745 = vsel %vm2248, %v2744, %v2740
    %v2746 = vlaneseq
    %v2747 = vshrl.u32 %v2746, 7
    %v2748 = vsub.s32 %v2250, %v2747
    %v2749 = vrot.slane %v2034, %v2748
    %v2750 = vsel %vm2255, %v2749, %v2745
    %v2751 = vlaneseq
    %v2752 = vshrl.u32 %v2751, 7
    %v2753 = vsub.s32 %v2257, %v2752
    %v2754 = vrot.slane %v2036, %v2753
    %v2755 = vsel %vm2262, %v2754, %v2750
    %v2756 = vlaneseq
    %v2757 = vshrl.u32 %v2756, 7
    %v2758 = vsub.s32 %v2264, %v2757
    %v2759 = vrot.slane %v2038, %v2758
    %v2760 = vsel %vm2269, %v2759, %v2755
    %v2761 = vlaneseq
    %v2762 = vshrl.u32 %v2761, 7
    %v2763 = vsub.s32 %v2271, %v2762
    %v2764 = vrot.slane %v2040, %v2763
    %v2765 = vsel %vm2276, %v2764, %v2760
    %v2766 = vlaneseq
    %v2767 = vshrl.u32 %v2766, 7
    %v2768 = vsub.s32 %v2278, %v2767
    %v2769 = vrot.slane %v2042, %v2768
    %v2770 = vsel %vm2283, %v2769, %v2765
    %v2771 = vlaneseq
    %v2772 = vshrl.u32 %v2771, 7
    %v2773 = vsub.s32 %v2285, %v2772
    %v2774 = vrot.slane %v2044, %v2773
    %v2775 = vsel %vm2290, %v2774, %v2770
    %v2776 = vlaneseq
    %v2777 = vshrl.u32 %v2776, 7
    %v2778 = vsub.s32 %v2292, %v2777
    %v2779 = vrot.slane %v2046, %v2778
    %v2780 = vsel %vm2297, %v2779, %v2775
    %v2781 = vlaneseq
    %v2782 = vshrl.u32 %v2781, 7
    %v2783 = vsub.s32 %v2299, %v2782
    %v2784 = vrot.slane %v2048, %v2783
    %v2785 = vsel %vm2304, %v2784, %v2780
    %v2786 = vlaneseq
    %v2787 = vshrl.u32 %v2786, 7
    %v2788 = vsub.s32 %v2306, %v2787
    %v2789 = vrot.slane %v2050, %v2788
    %v2790 = vsel %vm2311, %v2789, %v2785
    %v2791 = vlaneseq
    %v2792 = vshrl.u32 %v2791, 7
    %v2793 = vsub.s32 %v2313, %v2792
    %v2794 = vrot.slane %v2052, %v2793
    %v2795 = vsel %vm2318, %v2794, %v2790
    %v2796 = vlaneseq
    %v2797 = vshrl.u32 %v2796, 7
    %v2798 = vsub.s32 %v2320, %v2797
    %v2799 = vrot.slane %v2054, %v2798
    %v2800 = vsel %vm2325, %v2799, %v2795
    %v2801 = vlaneseq
    %v2802 = vshrl.u32 %v2801, 7
    %v2803 = vsub.s32 %v2217, %v2802
    %v2804 = vrot.slane %v2056, %v2803
    %v2805 = vlaneseq
    %v2806 = vshrl.u32 %v2805, 7
    %v2807 = vsub.s32 %v2222, %v2806
    %v2808 = vrot.slane %v2058, %v2807
    %v2809 = vsel %vm2227, %v2808, %v2804
    %v2810 = vlaneseq
    %v2811 = vshrl.u32 %v2810, 7
    %v2812 = vsub.s32 %v2229, %v2811
    %v2813 = vrot.slane %v2060, %v2812
    %v2814 = vsel %vm2234, %v2813, %v2809
    %v2815 = vlaneseq
    %v2816 = vshrl.u32 %v2815, 7
    %v2817 = vsub.s32 %v2236, %v2816
    %v2818 = vrot.slane %v2062, %v2817
    %v2819 = vsel %vm2241, %v2818, %v2814
    %v2820 = vlaneseq
    %v2821 = vshrl.u32 %v2820, 7
    %v2822 = vsub.s32 %v2243, %v2821
    %v2823 = vrot.slane %v2064, %v2822
    %v2824 = vsel %vm2248, %v2823, %v2819
    %v2825 = vlaneseq
    %v2826 = vshrl.u32 %v2825, 7
    %v2827 = vsub.s32 %v2250, %v2826
    %v2828 = vrot.slane %v2066, %v2827
    %v2829 = vsel %vm2255, %v2828, %v2824
    %v2830 = vlaneseq
    %v2831 = vshrl.u32 %v2830, 7
    %v2832 = vsub.s32 %v2257, %v2831
    %v2833 = vrot.slane %v2068, %v2832
    %v2834 = vsel %vm2262, %v2833, %v2829
    %v2835 = vlaneseq
    %v2836 = vshrl.u32 %v2835, 7
    %v2837 = vsub.s32 %v2264, %v2836
    %v2838 = vrot.slane %v2070, %v2837
    %v2839 = vsel %vm2269, %v2838, %v2834
    %v2840 = vlaneseq
    %v2841 = vshrl.u32 %v2840, 7
    %v2842 = vsub.s32 %v2271, %v2841
    %v2843 = vrot.slane %v2072, %v2842
    %v2844 = vsel %vm2276, %v2843, %v2839
    %v2845 = vlaneseq
    %v2846 = vshrl.u32 %v2845, 7
    %v2847 = vsub.s32 %v2278, %v2846
    %v2848 = vrot.slane %v2074, %v2847
    %v2849 = vsel %vm2283, %v2848, %v2844
    %v2850 = vlaneseq
    %v2851 = vshrl.u32 %v2850, 7
    %v2852 = vsub.s32 %v2285, %v2851
    %v2853 = vrot.slane %v2076, %v2852
    %v2854 = vsel %vm2290, %v2853, %v2849
    %v2855 = vlaneseq
    %v2856 = vshrl.u32 %v2855, 7
    %v2857 = vsub.s32 %v2292, %v2856
    %v2858 = vrot.slane %v2078, %v2857
    %v2859 = vsel %vm2297, %v2858, %v2854
    %v2860 = vlaneseq
    %v2861 = vshrl.u32 %v2860, 7
    %v2862 = vsub.s32 %v2299, %v2861
    %v2863 = vrot.slane %v2080, %v2862
    %v2864 = vsel %vm2304, %v2863, %v2859
    %v2865 = vlaneseq
    %v2866 = vshrl.u32 %v2865, 7
    %v2867 = vsub.s32 %v2306, %v2866
    %v2868 = vrot.slane %v2082, %v2867
    %v2869 = vsel %vm2311, %v2868, %v2864
    %v2870 = vlaneseq
    %v2871 = vshrl.u32 %v2870, 7
    %v2872 = vsub.s32 %v2313, %v2871
    %v2873 = vrot.slane %v2084, %v2872
    %v2874 = vsel %vm2318, %v2873, %v2869
    %v2875 = vlaneseq
    %v2876 = vshrl.u32 %v2875, 7
    %v2877 = vsub.s32 %v2320, %v2876
    %v2878 = vrot.slane %v2086, %v2877
    %v2879 = vsel %vm2325, %v2878, %v2874
    %vm2880 = vcmask 1041409
    %v2881 = vsel %vm2880, %v2405, %v2326
    %vm2882 = vcmask 1042434
    %v2883 = vsel %vm2882, %v2484, %v2881
    %vm2884 = vcmask 1043459
    %v2885 = vsel %vm2884, %v2563, %v2883
    %vm2886 = vcmask 1044484
    %v2887 = vsel %vm2886, %v2642, %v2885
    %vm2888 = vcmask 1045509
    %v2889 = vsel %vm2888, %v2721, %v2887
    %vm2890 = vcmask 1046534
    %v2891 = vsel %vm2890, %v2800, %v2889
    %vm2892 = vcmask 1047559
    %v2893 = vsel %vm2892, %v2879, %v2891
    %s2895 = sshra.s32 %s2087, 7
    %s2896 = sand.u32 %s2087, 127
    %s2897 = scalar_lea.vmem [#allocation2], %s2895
    %2898 = vst [vmem:[%s2897] sm:$0xff] %v2893
    // Predicated region
    $region30: #{tpu_custom_call.1} parent=1 // pred_check
      %p2899 = pneg %p24
    $region31: #{tpu_custom_call.1} parent=1 // pred_check_branch
      %2901 = sbr.rel (%p2899) target = $region33
    $region32: #{tpu_custom_call.1} parent=1 // pred_region
      %v2902 = vld [vmem:[#allocation2] sm:$0xff]
      %vm2903 = vcmp.lt.s32.totalorder %v2217, 8
      %v2904 = vsel %vm2903, %v2902, -1e+30
      %2905 = vmax.xlane.f32.xlu0 %v2904
      %v2906 = vpop.xlane.xlu0 %2905
      %v2907 = vsub.f32 %v2904, %v2906
      %v2908 = vmul.f32 %v2907, 1.442695
      %v2909 = vpow.pop %v2908
      %v2910 = vsel %vm2903, %v2909, 0.0
      %2911 = vadd.xlane.f32.xlu0 %v2910
      %v2912 = vpop.xlane.xlu0 %2911
      %v2913 = vrcp.pop %v2912
      %v2914 = vmul.f32 %v2910, %v2913
      %2915 = vst [vmem:[#allocation4] sm:$0xff] %v2914
    $region33: #{tpu_custom_call.1} parent=1 // pred_fallthru
      _
    // Predicated region
    $region34: #{tpu_custom_call.1} parent=1 // pred_check
      _
    $region35: #{tpu_custom_call.1} parent=1 // pred_check_branch
      %2917 = sbr.rel (0) target = $region37
    $region36: #{tpu_custom_call.1} parent=1 // pred_region
      %s2919 = ssub.s32 128, 128
      %2920 = vsyncadd [#allocation5], %s2919
      %s2922 = sshll.u32 [#allocation4], 4
      %s2923 = int_to_ptr.vmem [resolvable:$true] %s2922
      %2925 = dma.vmem_to_hbm [thread:$0]  %s2923, 128, %s6, [#allocation5]
    $region37: #{tpu_custom_call.1} parent=1 // pred_fallthru
      _
    // Predicated region
    $region38: #{tpu_custom_call.1} parent=1 // pred_check
      _
    $region39: #{tpu_custom_call.1} parent=1 // pred_check_branch
      %2927 = sbr.rel (0) target = $region41
    $region40: #{tpu_custom_call.1} parent=1 // pred_region
      %2928 = dma.done [#allocation5], 128
    $region41: #{tpu_custom_call.1} parent=1 // pred_fallthru
      _
    %2929 = vsyncpa [#allocation5], 1

</llo_original>
